<compile_context>
chip_gen: v7x
topology: tpu7x:2x2x1
jax: 0.10.0
libtpu: 0.0.40
codegen_flags: <defaults>
</compile_context>

<pallas_src>
import jax
import jax.numpy as jnp
from jax.experimental import pallas as pl
from jax.experimental.pallas import tpu as pltpu

C_IN, C_OUT = 4, 8
N, H, W = 2, 16, 16
HO, WO = H // 2, W // 2
WCI = W * C_IN                     # 64  input lanes per row
WCO = W * C_OUT                    # 128 intermediate lanes per row
OUT_ROWS = HO // 2                 # 4   packed output rows per image
OUT_LANES = 2 * WO * C_OUT         # 128 output lanes (two pooled rows per vector row)
BN_EPS = 1e-5


# ---------------------------------------------------------------------------
# Fused kernel: ReLU+SepConv+BN (x2) -> MaxPool(3,2,1) -> skip 1x1(s2)+BN -> add
# Processes one image per grid step.
# ---------------------------------------------------------------------------
def fused_block_kernel(x_ref, dw1_ref, pw1_ref, b1_ref,
                       dw2_ref, pw2_ref, b2_ref,
                       rsa_ref, rsb_ref, ca_ref, cb_ref,
                       ma_ref, mb_ref, bsk_ref, out_ref):
    f32 = jnp.float32
    x = x_ref[...]                                          # (H, W*C_IN)

    def depthwise3x3(xr, dw_ref, c):
        """Zero-padded 3x3 depthwise conv on an (H, W*c) lane-flattened map."""
        h, wc = xr.shape
        rows = jax.lax.broadcasted_iota(jnp.int32, (h, wc), 0)
        lanes = jax.lax.broadcasted_iota(jnp.int32, (h, wc), 1)
        zero = jnp.zeros_like(xr)
        # dy taps: row shift via XLU roll, zero the wrapped boundary row.
        r_up = jnp.where(rows == 0, zero, pltpu.roll(xr, 1, axis=0))            # x[h-1]
        r_dn = jnp.where(rows == h - 1, zero, pltpu.roll(xr, h - 1, axis=0))    # x[h+1]
        acc = None
        for dy, r in enumerate((r_up, xr, r_dn)):
            # dx taps: lane shift by one image column (= c lanes), zero wrapped lanes.
            c_lt = jnp.where(lanes < c, zero, pltpu.roll(r, c, axis=1))             # x[w-1]
            c_rt = jnp.where(lanes >= wc - c, zero, pltpu.roll(r, wc - c, axis=1))  # x[w+1]
            for dx, t in enumerate((c_lt, r, c_rt)):
                term = t * dw_ref[dy * 3 + dx]              # tap weight pre-broadcast (h, wc)
                acc = term if acc is None else acc + term
        return acc

    # ---- SeparableConv1 (ReLU -> depthwise 3x3 -> pointwise 1x1) + BN1 ----
    d1 = depthwise3x3(jnp.maximum(x, 0.0), dw1_ref, C_IN)                       # (H, 64)
    y1 = jnp.dot(d1, pw1_ref[...], preferred_element_type=f32) + b1_ref[...]    # (H, 128)

    # ---- SeparableConv2 + BN2 ----
    d2 = depthwise3x3(jnp.maximum(y1, 0.0), dw2_ref, C_OUT)                     # (H, 128)
    y2 = jnp.dot(d2, pw2_ref[...], preferred_element_type=f32) + b2_ref[...]    # (H, 128)

    # ---- MaxPool2d(3, stride=2, pad=1): separable max with -inf boundaries ----
    h, wc = y2.shape
    rows = jax.lax.broadcasted_iota(jnp.int32, (h, wc), 0)
    lanes = jax.lax.broadcasted_iota(jnp.int32, (h, wc), 1)
    ninf = jnp.full_like(y2, -jnp.inf)
    h_lt = jnp.where(lanes < C_OUT, ninf, pltpu.roll(y2, C_OUT, axis=1))        # col w-1
    h_rt = jnp.where(lanes >= wc - C_OUT, ninf, pltpu.roll(y2, wc - C_OUT, axis=1))  # col w+1
    hm = jnp.maximum(jnp.maximum(h_lt, y2), h_rt)
    v_up = jnp.where(rows == 0, ninf, pltpu.roll(hm, 1, axis=0))                # row h-1
    v_dn = jnp.where(rows == h - 1, ninf, pltpu.roll(hm, h - 1, axis=0))        # row h+1
    vm = jnp.maximum(jnp.maximum(v_up, hm), v_dn)          # 3x3 max centered at every (h, w)

    # ---- Stride-2 subsample + lane-dense (4,128) pack on the idle MXU ----
    # Even pooled rows (ho=0,2,4,6 -> vm rows 0,4,8,12) land in lanes [0,64),
    # odd pooled rows (ho=1,3,5,7 -> vm rows 2,6,10,14) land in lanes [64,128).
    va = jnp.dot(rsa_ref[...], vm, preferred_element_type=f32)                  # (4, 128)
    vb = jnp.dot(rsb_ref[...], vm, preferred_element_type=f32)                  # (4, 128)
    pooled = (jnp.dot(va, ca_ref[...], preferred_element_type=f32) +
              jnp.dot(vb, cb_ref[...], preferred_element_type=f32))             # (4, 128)

    # ---- Skip path: 1x1 conv stride 2 + BN (fully folded into Ma/Mb/bsk) ----
    xa = x_ref[pl.ds(0, OUT_ROWS, stride=4), :]            # rows 0,4,8,12  (h = 2*even ho)
    xb = x_ref[pl.ds(2, OUT_ROWS, stride=4), :]            # rows 2,6,10,14 (h = 2*odd  ho)
    skip = (jnp.dot(xa, ma_ref[...], preferred_element_type=f32) +
            jnp.dot(xb, mb_ref[...], preferred_element_type=f32) + bsk_ref[...])

    out_ref[0] = pooled + skip                             # (4, 128) lane-dense packed rows


# ---------------------------------------------------------------------------
# One-time host-side weight repack (fold BN, flatten (w, c) onto lanes, build
# the block-diagonal pointwise / 0-1 selection matrices used by the kernel).
# ---------------------------------------------------------------------------
def pack_params(p):
    f32 = jnp.float32

    def bn_fold(wmat, bn):
        scale = bn["gamma"] / jnp.sqrt(bn["var"] + BN_EPS)
        shift = bn["beta"] - bn["mean"] * scale
        return wmat * scale[None, :], shift

    pw1_s, sh1 = bn_fold(p["pw1"], p["bn1"])
    pw2_s, sh2 = bn_fold(p["pw2"], p["bn2"])
    wsk_s, shsk = bn_fold(p["w_skip"], p["bn_skip"])

    eye_w = jnp.eye(W, dtype=f32)
    packed = dict(
        # depthwise taps, pre-broadcast over the H vector rows (no in-kernel broadcast)
        dw1=jnp.broadcast_to(jnp.tile(p["dw1"].reshape(9, C_IN), (1, W))[:, None, :],
                             (9, H, WCI)),
        dw2=jnp.broadcast_to(jnp.tile(p["dw2"].reshape(9, C_OUT), (1, W))[:, None, :],
                             (9, H, WCO)),
        # pointwise 1x1 convs as block-diagonal matmuls over the (w, c) lane layout
        pw1=jnp.kron(eye_w, pw1_s),                        # (64, 128)
        pw2=jnp.kron(eye_w, pw2_s),                        # (128, 128)
        b1=jnp.tile(sh1, W).reshape(1, WCO),
        b2=jnp.tile(sh2, W).reshape(1, WCO),
    )
    # stride-2 row-selection matrices (even / odd pooled output rows)
    r_idx = jnp.arange(OUT_ROWS)
    packed["rsa"] = jnp.zeros((OUT_ROWS, H), f32).at[r_idx, 4 * r_idx].set(1.0)
    packed["rsb"] = jnp.zeros((OUT_ROWS, H), f32).at[r_idx, 4 * r_idx + 2].set(1.0)
    # stride-2 column-selection / lane-packing matrices (keep even w)
    e2 = jnp.zeros((W, WO), f32).at[2 * jnp.arange(WO), jnp.arange(WO)].set(1.0)
    csel = jnp.kron(e2, jnp.eye(C_OUT, dtype=f32))         # (128, 64)
    zc = jnp.zeros_like(csel)
    packed["ca"] = jnp.concatenate([csel, zc], axis=1)     # even ho -> lanes [0, 64)
    packed["cb"] = jnp.concatenate([zc, csel], axis=1)     # odd  ho -> lanes [64, 128)
    # skip path: stride-2 column subsample folded together with the 1x1 conv weights
    msel = (jnp.kron(e2, jnp.eye(C_IN, dtype=f32)) @
            jnp.kron(jnp.eye(WO, dtype=f32), wsk_s))       # (64, 64)
    zm = jnp.zeros_like(msel)
    packed["ma"] = jnp.concatenate([msel, zm], axis=1)     # (64, 128)
    packed["mb"] = jnp.concatenate([zm, msel], axis=1)
    packed["bsk"] = jnp.tile(shsk, 2 * WO).reshape(1, OUT_LANES)
    return packed


# ---------------------------------------------------------------------------
# Wrapper
# ---------------------------------------------------------------------------
@jax.jit
def block_forward(inp, packed):
    """inp: (N, H, W, C_IN) NHWC float32 -> (N, H/2, W/2, C_OUT)."""
    n = inp.shape[0]
    x_rows = inp.reshape(n * H, WCI)                       # lane-flattened rows

    def full_spec(shape):
        nd = len(shape)
        return pl.BlockSpec(shape, lambda i: (0,) * nd)

    out = pl.pallas_call(
        fused_block_kernel,
        out_shape=jax.ShapeDtypeStruct((n, OUT_ROWS, OUT_LANES), jnp.float32),
        grid=(n,),
        in_specs=[
            pl.BlockSpec((H, WCI), lambda i: (i, 0)),      # one image per grid step
            full_spec((9, H, WCI)), full_spec((WCI, WCO)), full_spec((1, WCO)),
            full_spec((9, H, WCO)), full_spec((WCO, WCO)), full_spec((1, WCO)),
            full_spec((OUT_ROWS, H)), full_spec((OUT_ROWS, H)),
            full_spec((WCO, WCO)), full_spec((WCO, WCO)),
            full_spec((WCI, WCO)), full_spec((WCI, WCO)), full_spec((1, WCO)),
        ],
        out_specs=pl.BlockSpec((1, OUT_ROWS, OUT_LANES), lambda i: (i, 0, 0)),
        compiler_params=pltpu.CompilerParams(
            dimension_semantics=("parallel",)),            # one image per TC on v7x
    )(x_rows, packed["dw1"], packed["pw1"], packed["b1"],
      packed["dw2"], packed["pw2"], packed["b2"],
      packed["rsa"], packed["rsb"], packed["ca"], packed["cb"],
      packed["ma"], packed["mb"], packed["bsk"])
    # (n, 4, 128) -> (n, Ho, Wo, C_OUT): the packed layout is bit-identical row-major.
    return out.reshape(n, HO, WO, C_OUT)


# ---------------------------------------------------------------------------
# Pure-JAX reference (for correctness check)
# ---------------------------------------------------------------------------
def reference_block(inp, p):
    def bn(x, b):
        return (x - b["mean"]) / jnp.sqrt(b["var"] + BN_EPS) * b["gamma"] + b["beta"]

    def sep(x, dw, pw):
        xr = jnp.maximum(x, 0.0)
        c = x.shape[-1]
        d = jax.lax.conv_general_dilated(
            xr, dw.reshape(3, 3, 1, c), (1, 1), ((1, 1), (1, 1)),
            dimension_numbers=("NHWC", "HWIO", "NHWC"), feature_group_count=c)
        return jnp.einsum("nhwc,co->nhwo", d, pw)

    x = bn(sep(inp, p["dw1"], p["pw1"]), p["bn1"])
    x = bn(sep(x, p["dw2"], p["pw2"]), p["bn2"])
    x = jax.lax.reduce_window(x, -jnp.inf, jax.lax.max,
                              (1, 3, 3, 1), (1, 2, 2, 1),
                              ((0, 0), (1, 1), (1, 1), (0, 0)))
    y = jnp.einsum("nhwc,co->nhwo", inp[:, ::2, ::2, :], p["w_skip"])
    return x + bn(y, p["bn_skip"])


# ---------------------------------------------------------------------------
# Deterministic parameter init + run
# ---------------------------------------------------------------------------
def make_params(key):
    ks = jax.random.split(key, 8)

    def nrm(k, shape, s=0.2):
        return s * jax.random.normal(k, shape, jnp.float32)

    def bn(k):
        k1, k2, k3, k4 = jax.random.split(k, 4)
        return dict(gamma=1.0 + nrm(k1, (C_OUT,), 0.1),
                    beta=nrm(k2, (C_OUT,), 0.1),
                    mean=nrm(k3, (C_OUT,), 0.1),
                    var=1.0 + jax.random.uniform(k4, (C_OUT,), jnp.float32))

    return dict(
        dw1=nrm(ks[0], (3, 3, C_IN)), pw1=nrm(ks[1], (C_IN, C_OUT)), bn1=bn(ks[2]),
        dw2=nrm(ks[3], (3, 3, C_OUT)), pw2=nrm(ks[4], (C_OUT, C_OUT)), bn2=bn(ks[5]),
        w_skip=nrm(ks[6], (C_IN, C_OUT)), bn_skip=bn(ks[7]),
    )


if __name__ == "__main__":
    key = jax.random.PRNGKey(0)
    kp, kx = jax.random.split(key)
    params = make_params(kp)
    x = jax.random.normal(kx, (N, H, W, C_IN), jnp.float32)   # NHWC

    packed = pack_params(params)                               # one-time weight repack
    out = block_forward(x, packed)
    out = jax.block_until_ready(out)

    ref = reference_block(x, params)
    assert out.shape == (N, H // 2, W // 2, C_OUT), out.shape
    max_err = float(jnp.max(jnp.abs(out - ref)))
    assert jnp.allclose(out, ref, atol=1e-3, rtol=1e-2), max_err

    print("KERNEL_OK")
</pallas_src>

<mosaic_0001>
module attributes {stable_mosaic.version = 11 : i64} {
  func.func @fused_block_kernel(%arg0: i32, %arg1: memref<16x64xf32, #tpu.memory_space<vmem>>, %arg2: memref<9x16x64xf32, #tpu.memory_space<vmem>>, %arg3: memref<64x128xf32, #tpu.memory_space<vmem>>, %arg4: memref<1x128xf32, #tpu.memory_space<vmem>>, %arg5: memref<9x16x128xf32, #tpu.memory_space<vmem>>, %arg6: memref<128x128xf32, #tpu.memory_space<vmem>>, %arg7: memref<1x128xf32, #tpu.memory_space<vmem>>, %arg8: memref<4x16xf32, #tpu.memory_space<vmem>>, %arg9: memref<4x16xf32, #tpu.memory_space<vmem>>, %arg10: memref<128x128xf32, #tpu.memory_space<vmem>>, %arg11: memref<128x128xf32, #tpu.memory_space<vmem>>, %arg12: memref<64x128xf32, #tpu.memory_space<vmem>>, %arg13: memref<64x128xf32, #tpu.memory_space<vmem>>, %arg14: memref<1x128xf32, #tpu.memory_space<vmem>>, %arg15: memref<1x4x128xf32, #tpu.memory_space<vmem>>) attributes {dimension_semantics = [#tpu.dimension_semantics<parallel>], iteration_bounds = array<i64: 2>, scalar_prefetch = 0 : i64, scratch_operands = 0 : i64, tpu.core_type = #tpu.core_type<tc>, window_params = [{transform_indices = @transform_0, window_bounds = array<i64: 16, 64>}, {pipeline_mode = #tpu.pipeline_mode<synchronous>, transform_indices = @transform_1, window_bounds = array<i64: 9, 16, 64>}, {pipeline_mode = #tpu.pipeline_mode<synchronous>, transform_indices = @transform_2, window_bounds = array<i64: 64, 128>}, {pipeline_mode = #tpu.pipeline_mode<synchronous>, transform_indices = @transform_3, window_bounds = array<i64: 1, 128>}, {pipeline_mode = #tpu.pipeline_mode<synchronous>, transform_indices = @transform_4, window_bounds = array<i64: 9, 16, 128>}, {pipeline_mode = #tpu.pipeline_mode<synchronous>, transform_indices = @transform_5, window_bounds = array<i64: 128, 128>}, {pipeline_mode = #tpu.pipeline_mode<synchronous>, transform_indices = @transform_6, window_bounds = array<i64: 1, 128>}, {pipeline_mode = #tpu.pipeline_mode<synchronous>, transform_indices = @transform_7, window_bounds = array<i64: 4, 16>}, {pipeline_mode = #tpu.pipeline_mode<synchronous>, transform_indices = @transform_8, window_bounds = array<i64: 4, 16>}, {pipeline_mode = #tpu.pipeline_mode<synchronous>, transform_indices = @transform_9, window_bounds = array<i64: 128, 128>}, {pipeline_mode = #tpu.pipeline_mode<synchronous>, transform_indices = @transform_10, window_bounds = array<i64: 128, 128>}, {pipeline_mode = #tpu.pipeline_mode<synchronous>, transform_indices = @transform_11, window_bounds = array<i64: 64, 128>}, {pipeline_mode = #tpu.pipeline_mode<synchronous>, transform_indices = @transform_12, window_bounds = array<i64: 64, 128>}, {pipeline_mode = #tpu.pipeline_mode<synchronous>, transform_indices = @transform_13, window_bounds = array<i64: 1, 128>}, {transform_indices = @transform_14, window_bounds = array<i64: 1, 4, 128>}]} {
    %c0 = arith.constant 0 : index
    %c0_0 = arith.constant 0 : index
    %0 = vector.load %arg1[%c0, %c0_0] : memref<16x64xf32, #tpu.memory_space<vmem>>, vector<16x64xf32>
    %cst = arith.constant 0.000000e+00 : f32
    %1 = vector.broadcast %cst : f32 to vector<16x64xf32>
    %2 = arith.maximumf %0, %1 : vector<16x64xf32>
    %3 = tpu.iota {dimensions = array<i32: 0>} : vector<16x64xi32>
    %4 = tpu.iota {dimensions = array<i32: 1>} : vector<16x64xi32>
    %cst_1 = arith.constant 0.000000e+00 : f32
    %5 = vector.broadcast %cst_1 : f32 to vector<16x64xf32>
    %c0_i32 = arith.constant 0 : i32
    %6 = vector.broadcast %c0_i32 : i32 to vector<16x64xi32>
    %7 = arith.cmpi eq, %3, %6 : vector<16x64xi32>
    %c1_i32 = arith.constant 1 : i32
    %8 = tpu.dynamic_rotate %2 by %c1_i32 dim 0 : vector<16x64xf32>, i32 -> vector<16x64xf32>
    %9 = arith.select %7, %5, %8 : vector<16x64xi1>, vector<16x64xf32>
    %c15_i32 = arith.constant 15 : i32
    %10 = vector.broadcast %c15_i32 : i32 to vector<16x64xi32>
    %11 = arith.cmpi eq, %3, %10 : vector<16x64xi32>
    %c15_i32_2 = arith.constant 15 : i32
    %12 = tpu.dynamic_rotate %2 by %c15_i32_2 dim 0 : vector<16x64xf32>, i32 -> vector<16x64xf32>
    %13 = arith.select %11, %5, %12 : vector<16x64xi1>, vector<16x64xf32>
    %c4_i32 = arith.constant 4 : i32
    %14 = vector.broadcast %c4_i32 : i32 to vector<16x64xi32>
    %15 = arith.cmpi slt, %4, %14 : vector<16x64xi32>
    %c4_i32_3 = arith.constant 4 : i32
    %16 = tpu.dynamic_rotate %9 by %c4_i32_3 dim 1 : vector<16x64xf32>, i32 -> vector<16x64xf32>
    %17 = arith.select %15, %5, %16 : vector<16x64xi1>, vector<16x64xf32>
    %c60_i32 = arith.constant 60 : i32
    %18 = vector.broadcast %c60_i32 : i32 to vector<16x64xi32>
    %19 = arith.cmpi sge, %4, %18 : vector<16x64xi32>
    %c60_i32_4 = arith.constant 60 : i32
    %20 = tpu.dynamic_rotate %9 by %c60_i32_4 dim 1 : vector<16x64xf32>, i32 -> vector<16x64xf32>
    %21 = arith.select %19, %5, %20 : vector<16x64xi1>, vector<16x64xf32>
    %c0_5 = arith.constant 0 : index
    %c0_6 = arith.constant 0 : index
    %c0_7 = arith.constant 0 : index
    %22 = vector.load %arg2[%c0_5, %c0_6, %c0_7] : memref<9x16x64xf32, #tpu.memory_space<vmem>>, vector<1x16x64xf32>
    %23 = vector.shape_cast %22 : vector<1x16x64xf32> to vector<16x64xf32>
    %24 = arith.mulf %17, %23 : vector<16x64xf32>
    %c1 = arith.constant 1 : index
    %c0_8 = arith.constant 0 : index
    %c0_9 = arith.constant 0 : index
    %25 = vector.load %arg2[%c1, %c0_8, %c0_9] : memref<9x16x64xf32, #tpu.memory_space<vmem>>, vector<1x16x64xf32>
    %26 = vector.shape_cast %25 : vector<1x16x64xf32> to vector<16x64xf32>
    %27 = arith.mulf %9, %26 : vector<16x64xf32>
    %28 = arith.addf %24, %27 : vector<16x64xf32>
    %c2 = arith.constant 2 : index
    %c0_10 = arith.constant 0 : index
    %c0_11 = arith.constant 0 : index
    %29 = vector.load %arg2[%c2, %c0_10, %c0_11] : memref<9x16x64xf32, #tpu.memory_space<vmem>>, vector<1x16x64xf32>
    %30 = vector.shape_cast %29 : vector<1x16x64xf32> to vector<16x64xf32>
    %31 = arith.mulf %21, %30 : vector<16x64xf32>
    %32 = arith.addf %28, %31 : vector<16x64xf32>
    %c4_i32_12 = arith.constant 4 : i32
    %33 = vector.broadcast %c4_i32_12 : i32 to vector<16x64xi32>
    %34 = arith.cmpi slt, %4, %33 : vector<16x64xi32>
    %c4_i32_13 = arith.constant 4 : i32
    %35 = tpu.dynamic_rotate %2 by %c4_i32_13 dim 1 : vector<16x64xf32>, i32 -> vector<16x64xf32>
    %36 = arith.select %34, %5, %35 : vector<16x64xi1>, vector<16x64xf32>
    %c60_i32_14 = arith.constant 60 : i32
    %37 = vector.broadcast %c60_i32_14 : i32 to vector<16x64xi32>
    %38 = arith.cmpi sge, %4, %37 : vector<16x64xi32>
    %c60_i32_15 = arith.constant 60 : i32
    %39 = tpu.dynamic_rotate %2 by %c60_i32_15 dim 1 : vector<16x64xf32>, i32 -> vector<16x64xf32>
    %40 = arith.select %38, %5, %39 : vector<16x64xi1>, vector<16x64xf32>
    %c3 = arith.constant 3 : index
    %c0_16 = arith.constant 0 : index
    %c0_17 = arith.constant 0 : index
    %41 = vector.load %arg2[%c3, %c0_16, %c0_17] : memref<9x16x64xf32, #tpu.memory_space<vmem>>, vector<1x16x64xf32>
    %42 = vector.shape_cast %41 : vector<1x16x64xf32> to vector<16x64xf32>
    %43 = arith.mulf %36, %42 : vector<16x64xf32>
    %44 = arith.addf %32, %43 : vector<16x64xf32>
    %c4 = arith.constant 4 : index
    %c0_18 = arith.constant 0 : index
    %c0_19 = arith.constant 0 : index
    %45 = vector.load %arg2[%c4, %c0_18, %c0_19] : memref<9x16x64xf32, #tpu.memory_space<vmem>>, vector<1x16x64xf32>
    %46 = vector.shape_cast %45 : vector<1x16x64xf32> to vector<16x64xf32>
    %47 = arith.mulf %2, %46 : vector<16x64xf32>
    %48 = arith.addf %44, %47 : vector<16x64xf32>
    %c5 = arith.constant 5 : index
    %c0_20 = arith.constant 0 : index
    %c0_21 = arith.constant 0 : index
    %49 = vector.load %arg2[%c5, %c0_20, %c0_21] : memref<9x16x64xf32, #tpu.memory_space<vmem>>, vector<1x16x64xf32>
    %50 = vector.shape_cast %49 : vector<1x16x64xf32> to vector<16x64xf32>
    %51 = arith.mulf %40, %50 : vector<16x64xf32>
    %52 = arith.addf %48, %51 : vector<16x64xf32>
    %c4_i32_22 = arith.constant 4 : i32
    %53 = vector.broadcast %c4_i32_22 : i32 to vector<16x64xi32>
    %54 = arith.cmpi slt, %4, %53 : vector<16x64xi32>
    %c4_i32_23 = arith.constant 4 : i32
    %55 = tpu.dynamic_rotate %13 by %c4_i32_23 dim 1 : vector<16x64xf32>, i32 -> vector<16x64xf32>
    %56 = arith.select %54, %5, %55 : vector<16x64xi1>, vector<16x64xf32>
    %c60_i32_24 = arith.constant 60 : i32
    %57 = vector.broadcast %c60_i32_24 : i32 to vector<16x64xi32>
    %58 = arith.cmpi sge, %4, %57 : vector<16x64xi32>
    %c60_i32_25 = arith.constant 60 : i32
    %59 = tpu.dynamic_rotate %13 by %c60_i32_25 dim 1 : vector<16x64xf32>, i32 -> vector<16x64xf32>
    %60 = arith.select %58, %5, %59 : vector<16x64xi1>, vector<16x64xf32>
    %c6 = arith.constant 6 : index
    %c0_26 = arith.constant 0 : index
    %c0_27 = arith.constant 0 : index
    %61 = vector.load %arg2[%c6, %c0_26, %c0_27] : memref<9x16x64xf32, #tpu.memory_space<vmem>>, vector<1x16x64xf32>
    %62 = vector.shape_cast %61 : vector<1x16x64xf32> to vector<16x64xf32>
    %63 = arith.mulf %56, %62 : vector<16x64xf32>
    %64 = arith.addf %52, %63 : vector<16x64xf32>
    %c7 = arith.constant 7 : index
    %c0_28 = arith.constant 0 : index
    %c0_29 = arith.constant 0 : index
    %65 = vector.load %arg2[%c7, %c0_28, %c0_29] : memref<9x16x64xf32, #tpu.memory_space<vmem>>, vector<1x16x64xf32>
    %66 = vector.shape_cast %65 : vector<1x16x64xf32> to vector<16x64xf32>
    %67 = arith.mulf %13, %66 : vector<16x64xf32>
    %68 = arith.addf %64, %67 : vector<16x64xf32>
    %c8 = arith.constant 8 : index
    %c0_30 = arith.constant 0 : index
    %c0_31 = arith.constant 0 : index
    %69 = vector.load %arg2[%c8, %c0_30, %c0_31] : memref<9x16x64xf32, #tpu.memory_space<vmem>>, vector<1x16x64xf32>
    %70 = vector.shape_cast %69 : vector<1x16x64xf32> to vector<16x64xf32>
    %71 = arith.mulf %60, %70 : vector<16x64xf32>
    %72 = arith.addf %68, %71 : vector<16x64xf32>
    %c0_32 = arith.constant 0 : index
    %c0_33 = arith.constant 0 : index
    %73 = vector.load %arg3[%c0_32, %c0_33] : memref<64x128xf32, #tpu.memory_space<vmem>>, vector<64x128xf32>
    %cst_34 = arith.constant dense<0.000000e+00> : vector<16x128xf32>
    %74 = tpu.matmul %72, %73, %cst_34 {dimension_numbers = #tpu.dot_dimension_numbers<[1], [0], [0], [1], [0, 0, 1, 1], [], []>} : vector<16x64xf32>, vector<64x128xf32>, vector<16x128xf32> -> vector<16x128xf32>
    %c0_35 = arith.constant 0 : index
    %c0_36 = arith.constant 0 : index
    %75 = vector.load %arg4[%c0_35, %c0_36] : memref<1x128xf32, #tpu.memory_space<vmem>>, vector<1x128xf32>
    %76 = vector.broadcast %75 : vector<1x128xf32> to vector<16x128xf32>
    %77 = arith.addf %74, %76 : vector<16x128xf32>
    %cst_37 = arith.constant 0.000000e+00 : f32
    %78 = vector.broadcast %cst_37 : f32 to vector<16x128xf32>
    %79 = arith.maximumf %77, %78 : vector<16x128xf32>
    %80 = tpu.iota {dimensions = array<i32: 0>} : vector<16x128xi32>
    %81 = tpu.iota {dimensions = array<i32: 1>} : vector<16x128xi32>
    %cst_38 = arith.constant 0.000000e+00 : f32
    %82 = vector.broadcast %cst_38 : f32 to vector<16x128xf32>
    %c0_i32_39 = arith.constant 0 : i32
    %83 = vector.broadcast %c0_i32_39 : i32 to vector<16x128xi32>
    %84 = arith.cmpi eq, %80, %83 : vector<16x128xi32>
    %c1_i32_40 = arith.constant 1 : i32
    %85 = tpu.dynamic_rotate %79 by %c1_i32_40 dim 0 : vector<16x128xf32>, i32 -> vector<16x128xf32>
    %86 = arith.select %84, %82, %85 : vector<16x128xi1>, vector<16x128xf32>
    %c15_i32_41 = arith.constant 15 : i32
    %87 = vector.broadcast %c15_i32_41 : i32 to vector<16x128xi32>
    %88 = arith.cmpi eq, %80, %87 : vector<16x128xi32>
    %c15_i32_42 = arith.constant 15 : i32
    %89 = tpu.dynamic_rotate %79 by %c15_i32_42 dim 0 : vector<16x128xf32>, i32 -> vector<16x128xf32>
    %90 = arith.select %88, %82, %89 : vector<16x128xi1>, vector<16x128xf32>
    %c8_i32 = arith.constant 8 : i32
    %91 = vector.broadcast %c8_i32 : i32 to vector<16x128xi32>
    %92 = arith.cmpi slt, %81, %91 : vector<16x128xi32>
    %c8_i32_43 = arith.constant 8 : i32
    %93 = tpu.dynamic_rotate %86 by %c8_i32_43 dim 1 : vector<16x128xf32>, i32 -> vector<16x128xf32>
    %94 = arith.select %92, %82, %93 : vector<16x128xi1>, vector<16x128xf32>
    %c120_i32 = arith.constant 120 : i32
    %95 = vector.broadcast %c120_i32 : i32 to vector<16x128xi32>
    %96 = arith.cmpi sge, %81, %95 : vector<16x128xi32>
    %c120_i32_44 = arith.constant 120 : i32
    %97 = tpu.dynamic_rotate %86 by %c120_i32_44 dim 1 : vector<16x128xf32>, i32 -> vector<16x128xf32>
    %98 = arith.select %96, %82, %97 : vector<16x128xi1>, vector<16x128xf32>
    %c0_45 = arith.constant 0 : index
    %c0_46 = arith.constant 0 : index
    %c0_47 = arith.constant 0 : index
    %99 = vector.load %arg5[%c0_45, %c0_46, %c0_47] : memref<9x16x128xf32, #tpu.memory_space<vmem>>, vector<1x16x128xf32>
    %100 = vector.shape_cast %99 : vector<1x16x128xf32> to vector<16x128xf32>
    %101 = arith.mulf %94, %100 : vector<16x128xf32>
    %c1_48 = arith.constant 1 : index
    %c0_49 = arith.constant 0 : index
    %c0_50 = arith.constant 0 : index
    %102 = vector.load %arg5[%c1_48, %c0_49, %c0_50] : memref<9x16x128xf32, #tpu.memory_space<vmem>>, vector<1x16x128xf32>
    %103 = vector.shape_cast %102 : vector<1x16x128xf32> to vector<16x128xf32>
    %104 = arith.mulf %86, %103 : vector<16x128xf32>
    %105 = arith.addf %101, %104 : vector<16x128xf32>
    %c2_51 = arith.constant 2 : index
    %c0_52 = arith.constant 0 : index
    %c0_53 = arith.constant 0 : index
    %106 = vector.load %arg5[%c2_51, %c0_52, %c0_53] : memref<9x16x128xf32, #tpu.memory_space<vmem>>, vector<1x16x128xf32>
    %107 = vector.shape_cast %106 : vector<1x16x128xf32> to vector<16x128xf32>
    %108 = arith.mulf %98, %107 : vector<16x128xf32>
    %109 = arith.addf %105, %108 : vector<16x128xf32>
    %c8_i32_54 = arith.constant 8 : i32
    %110 = vector.broadcast %c8_i32_54 : i32 to vector<16x128xi32>
    %111 = arith.cmpi slt, %81, %110 : vector<16x128xi32>
    %c8_i32_55 = arith.constant 8 : i32
    %112 = tpu.dynamic_rotate %79 by %c8_i32_55 dim 1 : vector<16x128xf32>, i32 -> vector<16x128xf32>
    %113 = arith.select %111, %82, %112 : vector<16x128xi1>, vector<16x128xf32>
    %c120_i32_56 = arith.constant 120 : i32
    %114 = vector.broadcast %c120_i32_56 : i32 to vector<16x128xi32>
    %115 = arith.cmpi sge, %81, %114 : vector<16x128xi32>
    %c120_i32_57 = arith.constant 120 : i32
    %116 = tpu.dynamic_rotate %79 by %c120_i32_57 dim 1 : vector<16x128xf32>, i32 -> vector<16x128xf32>
    %117 = arith.select %115, %82, %116 : vector<16x128xi1>, vector<16x128xf32>
    %c3_58 = arith.constant 3 : index
    %c0_59 = arith.constant 0 : index
    %c0_60 = arith.constant 0 : index
    %118 = vector.load %arg5[%c3_58, %c0_59, %c0_60] : memref<9x16x128xf32, #tpu.memory_space<vmem>>, vector<1x16x128xf32>
    %119 = vector.shape_cast %118 : vector<1x16x128xf32> to vector<16x128xf32>
    %120 = arith.mulf %113, %119 : vector<16x128xf32>
    %121 = arith.addf %109, %120 : vector<16x128xf32>
    %c4_61 = arith.constant 4 : index
    %c0_62 = arith.constant 0 : index
    %c0_63 = arith.constant 0 : index
    %122 = vector.load %arg5[%c4_61, %c0_62, %c0_63] : memref<9x16x128xf32, #tpu.memory_space<vmem>>, vector<1x16x128xf32>
    %123 = vector.shape_cast %122 : vector<1x16x128xf32> to vector<16x128xf32>
    %124 = arith.mulf %79, %123 : vector<16x128xf32>
    %125 = arith.addf %121, %124 : vector<16x128xf32>
    %c5_64 = arith.constant 5 : index
    %c0_65 = arith.constant 0 : index
    %c0_66 = arith.constant 0 : index
    %126 = vector.load %arg5[%c5_64, %c0_65, %c0_66] : memref<9x16x128xf32, #tpu.memory_space<vmem>>, vector<1x16x128xf32>
    %127 = vector.shape_cast %126 : vector<1x16x128xf32> to vector<16x128xf32>
    %128 = arith.mulf %117, %127 : vector<16x128xf32>
    %129 = arith.addf %125, %128 : vector<16x128xf32>
    %c8_i32_67 = arith.constant 8 : i32
    %130 = vector.broadcast %c8_i32_67 : i32 to vector<16x128xi32>
    %131 = arith.cmpi slt, %81, %130 : vector<16x128xi32>
    %c8_i32_68 = arith.constant 8 : i32
    %132 = tpu.dynamic_rotate %90 by %c8_i32_68 dim 1 : vector<16x128xf32>, i32 -> vector<16x128xf32>
    %133 = arith.select %131, %82, %132 : vector<16x128xi1>, vector<16x128xf32>
    %c120_i32_69 = arith.constant 120 : i32
    %134 = vector.broadcast %c120_i32_69 : i32 to vector<16x128xi32>
    %135 = arith.cmpi sge, %81, %134 : vector<16x128xi32>
    %c120_i32_70 = arith.constant 120 : i32
    %136 = tpu.dynamic_rotate %90 by %c120_i32_70 dim 1 : vector<16x128xf32>, i32 -> vector<16x128xf32>
    %137 = arith.select %135, %82, %136 : vector<16x128xi1>, vector<16x128xf32>
    %c6_71 = arith.constant 6 : index
    %c0_72 = arith.constant 0 : index
    %c0_73 = arith.constant 0 : index
    %138 = vector.load %arg5[%c6_71, %c0_72, %c0_73] : memref<9x16x128xf32, #tpu.memory_space<vmem>>, vector<1x16x128xf32>
    %139 = vector.shape_cast %138 : vector<1x16x128xf32> to vector<16x128xf32>
    %140 = arith.mulf %133, %139 : vector<16x128xf32>
    %141 = arith.addf %129, %140 : vector<16x128xf32>
    %c7_74 = arith.constant 7 : index
    %c0_75 = arith.constant 0 : index
    %c0_76 = arith.constant 0 : index
    %142 = vector.load %arg5[%c7_74, %c0_75, %c0_76] : memref<9x16x128xf32, #tpu.memory_space<vmem>>, vector<1x16x128xf32>
    %143 = vector.shape_cast %142 : vector<1x16x128xf32> to vector<16x128xf32>
    %144 = arith.mulf %90, %143 : vector<16x128xf32>
    %145 = arith.addf %141, %144 : vector<16x128xf32>
    %c8_77 = arith.constant 8 : index
    %c0_78 = arith.constant 0 : index
    %c0_79 = arith.constant 0 : index
    %146 = vector.load %arg5[%c8_77, %c0_78, %c0_79] : memref<9x16x128xf32, #tpu.memory_space<vmem>>, vector<1x16x128xf32>
    %147 = vector.shape_cast %146 : vector<1x16x128xf32> to vector<16x128xf32>
    %148 = arith.mulf %137, %147 : vector<16x128xf32>
    %149 = arith.addf %145, %148 : vector<16x128xf32>
    %c0_80 = arith.constant 0 : index
    %c0_81 = arith.constant 0 : index
    %150 = vector.load %arg6[%c0_80, %c0_81] : memref<128x128xf32, #tpu.memory_space<vmem>>, vector<128x128xf32>
    %cst_82 = arith.constant dense<0.000000e+00> : vector<16x128xf32>
    %151 = tpu.matmul %149, %150, %cst_82 {dimension_numbers = #tpu.dot_dimension_numbers<[1], [0], [0], [1], [0, 0, 1, 1], [], []>} : vector<16x128xf32>, vector<128x128xf32>, vector<16x128xf32> -> vector<16x128xf32>
    %c0_83 = arith.constant 0 : index
    %c0_84 = arith.constant 0 : index
    %152 = vector.load %arg7[%c0_83, %c0_84] : memref<1x128xf32, #tpu.memory_space<vmem>>, vector<1x128xf32>
    %153 = vector.broadcast %152 : vector<1x128xf32> to vector<16x128xf32>
    %154 = arith.addf %151, %153 : vector<16x128xf32>
    %155 = tpu.iota {dimensions = array<i32: 0>} : vector<16x128xi32>
    %156 = tpu.iota {dimensions = array<i32: 1>} : vector<16x128xi32>
    %cst_85 = arith.constant 0xFF800000 : f32
    %157 = vector.broadcast %cst_85 : f32 to vector<16x128xf32>
    %c8_i32_86 = arith.constant 8 : i32
    %158 = vector.broadcast %c8_i32_86 : i32 to vector<16x128xi32>
    %159 = arith.cmpi slt, %156, %158 : vector<16x128xi32>
    %c8_i32_87 = arith.constant 8 : i32
    %160 = tpu.dynamic_rotate %154 by %c8_i32_87 dim 1 : vector<16x128xf32>, i32 -> vector<16x128xf32>
    %161 = arith.select %159, %157, %160 : vector<16x128xi1>, vector<16x128xf32>
    %c120_i32_88 = arith.constant 120 : i32
    %162 = vector.broadcast %c120_i32_88 : i32 to vector<16x128xi32>
    %163 = arith.cmpi sge, %156, %162 : vector<16x128xi32>
    %c120_i32_89 = arith.constant 120 : i32
    %164 = tpu.dynamic_rotate %154 by %c120_i32_89 dim 1 : vector<16x128xf32>, i32 -> vector<16x128xf32>
    %165 = arith.select %163, %157, %164 : vector<16x128xi1>, vector<16x128xf32>
    %166 = arith.maximumf %161, %154 : vector<16x128xf32>
    %167 = arith.maximumf %166, %165 : vector<16x128xf32>
    %c0_i32_90 = arith.constant 0 : i32
    %168 = vector.broadcast %c0_i32_90 : i32 to vector<16x128xi32>
    %169 = arith.cmpi eq, %155, %168 : vector<16x128xi32>
    %c1_i32_91 = arith.constant 1 : i32
    %170 = tpu.dynamic_rotate %167 by %c1_i32_91 dim 0 : vector<16x128xf32>, i32 -> vector<16x128xf32>
    %171 = arith.select %169, %157, %170 : vector<16x128xi1>, vector<16x128xf32>
    %c15_i32_92 = arith.constant 15 : i32
    %172 = vector.broadcast %c15_i32_92 : i32 to vector<16x128xi32>
    %173 = arith.cmpi eq, %155, %172 : vector<16x128xi32>
    %c15_i32_93 = arith.constant 15 : i32
    %174 = tpu.dynamic_rotate %167 by %c15_i32_93 dim 0 : vector<16x128xf32>, i32 -> vector<16x128xf32>
    %175 = arith.select %173, %157, %174 : vector<16x128xi1>, vector<16x128xf32>
    %176 = arith.maximumf %171, %167 : vector<16x128xf32>
    %177 = arith.maximumf %176, %175 : vector<16x128xf32>
    %c0_94 = arith.constant 0 : index
    %c0_95 = arith.constant 0 : index
    %178 = vector.load %arg8[%c0_94, %c0_95] : memref<4x16xf32, #tpu.memory_space<vmem>>, vector<4x16xf32>
    %cst_96 = arith.constant dense<0.000000e+00> : vector<4x128xf32>
    %179 = tpu.matmul %178, %177, %cst_96 {dimension_numbers = #tpu.dot_dimension_numbers<[1], [0], [0], [1], [0, 0, 1, 1], [], []>} : vector<4x16xf32>, vector<16x128xf32>, vector<4x128xf32> -> vector<4x128xf32>
    %c0_97 = arith.constant 0 : index
    %c0_98 = arith.constant 0 : index
    %180 = vector.load %arg9[%c0_97, %c0_98] : memref<4x16xf32, #tpu.memory_space<vmem>>, vector<4x16xf32>
    %cst_99 = arith.constant dense<0.000000e+00> : vector<4x128xf32>
    %181 = tpu.matmul %180, %177, %cst_99 {dimension_numbers = #tpu.dot_dimension_numbers<[1], [0], [0], [1], [0, 0, 1, 1], [], []>} : vector<4x16xf32>, vector<16x128xf32>, vector<4x128xf32> -> vector<4x128xf32>
    %c0_100 = arith.constant 0 : index
    %c0_101 = arith.constant 0 : index
    %182 = vector.load %arg10[%c0_100, %c0_101] : memref<128x128xf32, #tpu.memory_space<vmem>>, vector<128x128xf32>
    %cst_102 = arith.constant dense<0.000000e+00> : vector<4x128xf32>
    %183 = tpu.matmul %179, %182, %cst_102 {dimension_numbers = #tpu.dot_dimension_numbers<[1], [0], [0], [1], [0, 0, 1, 1], [], []>} : vector<4x128xf32>, vector<128x128xf32>, vector<4x128xf32> -> vector<4x128xf32>
    %c0_103 = arith.constant 0 : index
    %c0_104 = arith.constant 0 : index
    %184 = vector.load %arg11[%c0_103, %c0_104] : memref<128x128xf32, #tpu.memory_space<vmem>>, vector<128x128xf32>
    %cst_105 = arith.constant dense<0.000000e+00> : vector<4x128xf32>
    %185 = tpu.matmul %181, %184, %cst_105 {dimension_numbers = #tpu.dot_dimension_numbers<[1], [0], [0], [1], [0, 0, 1, 1], [], []>} : vector<4x128xf32>, vector<128x128xf32>, vector<4x128xf32> -> vector<4x128xf32>
    %186 = arith.addf %183, %185 : vector<4x128xf32>
    %c0_106 = arith.constant 0 : index
    %c0_107 = arith.constant 0 : index
    %187 = tpu.strided_load %arg1[%c0_106, %c0_107] {strides = array<i32: 4, 1>} : memref<16x64xf32, #tpu.memory_space<vmem>>, vector<4x64xf32>
    %c2_108 = arith.constant 2 : index
    %c0_109 = arith.constant 0 : index
    %188 = tpu.strided_load %arg1[%c2_108, %c0_109] {strides = array<i32: 4, 1>} : memref<16x64xf32, #tpu.memory_space<vmem>>, vector<4x64xf32>
    %c0_110 = arith.constant 0 : index
    %c0_111 = arith.constant 0 : index
    %189 = vector.load %arg12[%c0_110, %c0_111] : memref<64x128xf32, #tpu.memory_space<vmem>>, vector<64x128xf32>
    %cst_112 = arith.constant dense<0.000000e+00> : vector<4x128xf32>
    %190 = tpu.matmul %187, %189, %cst_112 {dimension_numbers = #tpu.dot_dimension_numbers<[1], [0], [0], [1], [0, 0, 1, 1], [], []>} : vector<4x64xf32>, vector<64x128xf32>, vector<4x128xf32> -> vector<4x128xf32>
    %c0_113 = arith.constant 0 : index
    %c0_114 = arith.constant 0 : index
    %191 = vector.load %arg13[%c0_113, %c0_114] : memref<64x128xf32, #tpu.memory_space<vmem>>, vector<64x128xf32>
    %cst_115 = arith.constant dense<0.000000e+00> : vector<4x128xf32>
    %192 = tpu.matmul %188, %191, %cst_115 {dimension_numbers = #tpu.dot_dimension_numbers<[1], [0], [0], [1], [0, 0, 1, 1], [], []>} : vector<4x64xf32>, vector<64x128xf32>, vector<4x128xf32> -> vector<4x128xf32>
    %193 = arith.addf %190, %192 : vector<4x128xf32>
    %c0_116 = arith.constant 0 : index
    %c0_117 = arith.constant 0 : index
    %194 = vector.load %arg14[%c0_116, %c0_117] : memref<1x128xf32, #tpu.memory_space<vmem>>, vector<1x128xf32>
    %195 = vector.broadcast %194 : vector<1x128xf32> to vector<4x128xf32>
    %196 = arith.addf %193, %195 : vector<4x128xf32>
    %197 = arith.addf %186, %196 : vector<4x128xf32>
    %c0_118 = arith.constant 0 : index
    %c0_119 = arith.constant 0 : index
    %c0_120 = arith.constant 0 : index
    %198 = vector.load %arg15[%c0_118, %c0_119, %c0_120] : memref<1x4x128xf32, #tpu.memory_space<vmem>>, vector<1x4x128xf32>
    %199 = vector.shape_cast %198 : vector<1x4x128xf32> to vector<4x128xf32>
    %200 = vector.shape_cast %197 : vector<4x128xf32> to vector<1x4x128xf32>
    tpu.vector_store %arg15[%c0_118, %c0_119, %c0_120], %200 {strides = array<i32>} : memref<1x4x128xf32, #tpu.memory_space<vmem>>, vector<1x4x128xf32>,
    return
  }
  func.func @transform_0(%arg0: i32) -> (i32, i32) {
    %c0_i32 = arith.constant 0 : i32
    %c0_i32_0 = arith.constant 0 : i32
    return %arg0, %c0_i32 : i32, i32
  }
  func.func @transform_1(%arg0: i32) -> (i32, i32, i32) {
    %c0_i32 = arith.constant 0 : i32
    %c0_i32_0 = arith.constant 0 : i32
    %c0_i32_1 = arith.constant 0 : i32
    %c0_i32_2 = arith.constant 0 : i32
    return %c0_i32, %c0_i32_0, %c0_i32_1 : i32, i32, i32
  }
  func.func @transform_2(%arg0: i32) -> (i32, i32) {
    %c0_i32 = arith.constant 0 : i32
    %c0_i32_0 = arith.constant 0 : i32
    %c0_i32_1 = arith.constant 0 : i32
    return %c0_i32, %c0_i32_0 : i32, i32
  }
  func.func @transform_3(%arg0: i32) -> (i32, i32) {
    %c0_i32 = arith.constant 0 : i32
    %c0_i32_0 = arith.constant 0 : i32
    %c0_i32_1 = arith.constant 0 : i32
    return %c0_i32, %c0_i32_0 : i32, i32
  }
  func.func @transform_4(%arg0: i32) -> (i32, i32, i32) {
    %c0_i32 = arith.constant 0 : i32
    %c0_i32_0 = arith.constant 0 : i32
    %c0_i32_1 = arith.constant 0 : i32
    %c0_i32_2 = arith.constant 0 : i32
    return %c0_i32, %c0_i32_0, %c0_i32_1 : i32, i32, i32
  }
  func.func @transform_5(%arg0: i32) -> (i32, i32) {
    %c0_i32 = arith.constant 0 : i32
    %c0_i32_0 = arith.constant 0 : i32
    %c0_i32_1 = arith.constant 0 : i32
    return %c0_i32, %c0_i32_0 : i32, i32
  }
  func.func @transform_6(%arg0: i32) -> (i32, i32) {
    %c0_i32 = arith.constant 0 : i32
    %c0_i32_0 = arith.constant 0 : i32
    %c0_i32_1 = arith.constant 0 : i32
    return %c0_i32, %c0_i32_0 : i32, i32
  }
  func.func @transform_7(%arg0: i32) -> (i32, i32) {
    %c0_i32 = arith.constant 0 : i32
    %c0_i32_0 = arith.constant 0 : i32
    %c0_i32_1 = arith.constant 0 : i32
    return %c0_i32, %c0_i32_0 : i32, i32
  }
  func.func @transform_8(%arg0: i32) -> (i32, i32) {
    %c0_i32 = arith.constant 0 : i32
    %c0_i32_0 = arith.constant 0 : i32
    %c0_i32_1 = arith.constant 0 : i32
    return %c0_i32, %c0_i32_0 : i32, i32
  }
  func.func @transform_9(%arg0: i32) -> (i32, i32) {
    %c0_i32 = arith.constant 0 : i32
    %c0_i32_0 = arith.constant 0 : i32
    %c0_i32_1 = arith.constant 0 : i32
    return %c0_i32, %c0_i32_0 : i32, i32
  }
  func.func @transform_10(%arg0: i32) -> (i32, i32) {
    %c0_i32 = arith.constant 0 : i32
    %c0_i32_0 = arith.constant 0 : i32
    %c0_i32_1 = arith.constant 0 : i32
    return %c0_i32, %c0_i32_0 : i32, i32
  }
  func.func @transform_11(%arg0: i32) -> (i32, i32) {
    %c0_i32 = arith.constant 0 : i32
    %c0_i32_0 = arith.constant 0 : i32
    %c0_i32_1 = arith.constant 0 : i32
    return %c0_i32, %c0_i32_0 : i32, i32
  }
  func.func @transform_12(%arg0: i32) -> (i32, i32) {
    %c0_i32 = arith.constant 0 : i32
    %c0_i32_0 = arith.constant 0 : i32
    %c0_i32_1 = arith.constant 0 : i32
    return %c0_i32, %c0_i32_0 : i32, i32
  }
  func.func @transform_13(%arg0: i32) -> (i32, i32) {
    %c0_i32 = arith.constant 0 : i32
    %c0_i32_0 = arith.constant 0 : i32
    %c0_i32_1 = arith.constant 0 : i32
    return %c0_i32, %c0_i32_0 : i32, i32
  }
  func.func @transform_14(%arg0: i32) -> (i32, i32, i32) {
    %c0_i32 = arith.constant 0 : i32
    %c0_i32_0 = arith.constant 0 : i32
    %c0_i32_1 = arith.constant 0 : i32
    return %arg0, %c0_i32, %c0_i32_0 : i32, i32, i32
  }
}

</mosaic_0001>

<llo_original>
// kernel: block_forward.1
$region0: #{block_forward.1}
  #allocation0 [shape = 'u32[]', space=smem, size = 0x4, offset = 0x4, fixed_abs, tag = 'smem constant byte address 0x4 - core index']
  #allocation1 [shape = 'u32[144,128]{1,0:T(1,128)}', space=vmem, size = 0x12000, scoped, tag = 'internal scratch']
  %s0 = inlined_call_operand.vmem [shape: f32[32,64], index: 0, kind: input, shape index: {}]
  %s1 = inlined_call_operand.vmem [shape: f32[9,16,64], index: 1, kind: input, shape index: {}]
  %s2 = inlined_call_operand.hbm [shape: f32[64,128], index: 2, kind: input, shape index: {}]
  %s3 = inlined_call_operand.hbm [shape: f32[1,128], index: 3, kind: input, shape index: {}]
  %s4 = inlined_call_operand.vmem [shape: f32[9,16,128], index: 4, kind: input, shape index: {}]
  %s5 = inlined_call_operand.vmem [shape: f32[128,128], index: 5, kind: input, shape index: {}]
  %s6 = inlined_call_operand.vmem [shape: f32[1,128], index: 6, kind: input, shape index: {}]
  %s7 = inlined_call_operand.vmem [shape: f32[4,16], index: 7, kind: input, shape index: {}]
  %s8 = inlined_call_operand.vmem [shape: f32[4,16], index: 8, kind: input, shape index: {}]
  %s9 = inlined_call_operand.vmem [shape: f32[128,128], index: 9, kind: input, shape index: {}]
  %s10 = inlined_call_operand.hbm [shape: f32[128,128], index: 10, kind: input, shape index: {}]
  %s11 = inlined_call_operand.hbm [shape: f32[64,128], index: 11, kind: input, shape index: {}]
  %s12 = inlined_call_operand.hbm [shape: f32[64,128], index: 12, kind: input, shape index: {}]
  %s13 = inlined_call_operand.vmem [shape: f32[1,128], index: 13, kind: input, shape index: {}]
  %s14 = inlined_call_operand.vmem [shape: f32[2,4,128], index: 14, kind: output, shape index: {}]
  %s15 = sld [smem:[#allocation0]]
  $region109: #{block_forward.1} parent=0
    _
  %s17 = ssub.s32 1, %s15
  %s18 = scalar_select 0, %s17, %s15
  $region1: #{block_forward.1} parent=0
    #allocation2 [shape = 'u8[32768]{0}', space=vmem, size = 0x8000, scoped, tag = 'input window, operand 2, single buffered']
    #allocation3 [shape = 's32[2]{0}', space=sflag, size = 0x8, scoped, tag = 'scoped memory for block_forward.1']
    #allocation4 [shape = 'u8[512]{0}', space=vmem, size = 0x400, scoped, tag = 'input window, operand 3, single buffered']
    #allocation5 [shape = 's32[1]{0}', space=sflag, size = 0x4, scoped, tag = 'scoped memory for block_forward.1']
    #allocation6 [shape = 'u8[65536]{0}', space=vmem, size = 0x10000, scoped, tag = 'input window, operand 10, single buffered']
    #allocation7 [shape = 'u8[32768]{0}', space=vmem, size = 0x8000, scoped, tag = 'input window, operand 11, single buffered']
    #allocation8 [shape = 's32[1]{0}', space=sflag, size = 0x4, scoped, tag = 'scoped memory for block_forward.1']
    #allocation9 [shape = 'u8[32768]{0}', space=vmem, size = 0x8000, scoped, tag = 'input window, operand 12, single buffered']
    %19 = vsyncpa [#allocation3], 0
    %20 = vsyncpa [#allocation5], 0
    %21 = vsyncpa [#allocation8], 0
    loop: start=0, step=1, limit=4
    $region2: #{block_forward.1} parent=1 // loop_pre_header
      _
    $region3: #{block_forward.1} parent=1 // loop_header
      %s23 = sphi 0, %s27
      %p24 = scmp.ge.s32.totalorder %s23, 4
      %s33 = sphi 0, %s35
      %s36 = sphi 0, %s33
      %s37 = sphi 0, %s36
      %s53 = sphi 0, %s37
      %s57 = sphi 0, %s57
      %s59 = sphi 0, %s57
      %s60 = sphi 0, %s59
      %s74 = sphi 0, %s60
      %s78 = sphi 0, %s78
      %s80 = sphi 0, %s78
      %s81 = sphi 0, %s80
      %s95 = sphi 0, %s81
      %s99 = sphi 0, %s99
      %s101 = sphi 0, %s99
      %s102 = sphi 0, %s101
      %s116 = sphi 0, %s102
      %s120 = sphi 0, %s120
      %s122 = sphi 0, %s120
      %s123 = sphi 0, %s122
      %s137 = sphi 0, %s123
      %s141 = sphi 0, %s141
      %s143 = sphi 0, %s141
      %s144 = sphi 0, %s143
      %s158 = sphi 0, %s144
      %s162 = sphi 0, %s162
      %s164 = sphi 0, %s162
      %s165 = sphi 0, %s164
      %s179 = sphi 0, %s165
      %s183 = sphi 0, %s183
      %s185 = sphi 0, %s183
      %s186 = sphi 0, %s185
      %s200 = sphi 0, %s186
      %s204 = sphi 0, %s204
      %s206 = sphi 0, %s204
      %s207 = sphi 0, %s206
      %s221 = sphi 0, %s207
      %s225 = sphi 0, %s225
      %s227 = sphi 0, %s225
      %s228 = sphi 0, %s227
      %s242 = sphi 0, %s228
      %s246 = sphi 0, %s246
      %s248 = sphi 0, %s246
      %s249 = sphi 0, %s248
      %s263 = sphi 0, %s249
      %s267 = sphi 0, %s267
      %s269 = sphi 0, %s267
      %s270 = sphi 0, %s269
      %s284 = sphi 0, %s270
      %s288 = sphi 0, %s288
      %s290 = sphi 0, %s288
      %s291 = sphi 0, %s290
      %s305 = sphi 0, %s291
      %s309 = sphi 0, %s309
      %s311 = sphi 0, %s309
      %s312 = sphi 0, %s311
      %s326 = sphi 0, %s312
      %s332 = sphi 0, %s334
      %s335 = sphi 0, %s332
      %s336 = sphi 0, %s335
      %s352 = sphi 0, %s336
    $region4: #{block_forward.1} parent=1 // loop_header_branch
      %26 = sbr.rel (%p24) target = $region8
    $region5: #{block_forward.1} parent=1 // loop_body
      %s28 = ssub.s32 %s23, 1
      %s29 = ssub.s32 %s23, 2
      %s30 = sadd.s32 %s23, 1
      %s31 = ssub.s32 %s23, %s30
      %p32 = scmp.eq.s32.totalorder %s31, 0
      %s34 = sadd.s32 %s33, 1
      %s35 = scalar_select %p32, %s33, %s34
      %p38 = pneg %p32
      %p39 = scmp.eq.s32.totalorder %s23, 1
      %p40 = por %p38, %p39
      %p41 = scmp.ne.s32.totalorder %s33, %s36
      %p42 = scmp.eq.s32.totalorder %s23, 0
      %p43 = por %p41, %p42
      %p44 = scmp.ne.s32.totalorder %s33, %s36
      %p45 = scmp.eq.s32.totalorder %s28, 1
      %p46 = por %p44, %p45
      %p47 = scmp.ne.s32.totalorder %s36, %s37
      %p48 = scmp.eq.s32.totalorder %s28, 0
      %p49 = por %p47, %p48
      %p50 = scmp.ne.s32.totalorder %s36, %s37
      %p51 = scmp.eq.s32.totalorder %s29, 1
      %p52 = por %p50, %p51
      %p54 = scmp.ne.s32.totalorder %s37, %s53
      %p55 = scmp.eq.s32.totalorder %s29, 0
      %p56 = por %p54, %p55
      %s58 = sadd.s32 %s57, 1
      %p61 = scmp.eq.s32.totalorder %s23, 1
      %p62 = scmp.ne.s32.totalorder %s57, %s59
      %p63 = scmp.eq.s32.totalorder %s23, 0
      %p64 = por %p62, %p63
      %p65 = scmp.ne.s32.totalorder %s57, %s59
      %p66 = scmp.eq.s32.totalorder %s28, 1
      %p67 = por %p65, %p66
      %p68 = scmp.ne.s32.totalorder %s59, %s60
      %p69 = scmp.eq.s32.totalorder %s28, 0
      %p70 = por %p68, %p69
      %p71 = scmp.ne.s32.totalorder %s59, %s60
      %p72 = scmp.eq.s32.totalorder %s29, 1
      %p73 = por %p71, %p72
      %p75 = scmp.ne.s32.totalorder %s60, %s74
      %p76 = scmp.eq.s32.totalorder %s29, 0
      %p77 = por %p75, %p76
      %s79 = sadd.s32 %s78, 1
      %p82 = scmp.eq.s32.totalorder %s23, 1
      %p83 = scmp.ne.s32.totalorder %s78, %s80
      %p84 = scmp.eq.s32.totalorder %s23, 0
      %p85 = por %p83, %p84
      %p86 = scmp.ne.s32.totalorder %s78, %s80
      %p87 = scmp.eq.s32.totalorder %s28, 1
      %p88 = por %p86, %p87
      %p89 = scmp.ne.s32.totalorder %s80, %s81
      %p90 = scmp.eq.s32.totalorder %s28, 0
      %p91 = por %p89, %p90
      %p92 = scmp.ne.s32.totalorder %s80, %s81
      %p93 = scmp.eq.s32.totalorder %s29, 1
      %p94 = por %p92, %p93
      %p96 = scmp.ne.s32.totalorder %s81, %s95
      %p97 = scmp.eq.s32.totalorder %s29, 0
      %p98 = por %p96, %p97
      %s100 = sadd.s32 %s99, 1
      %p103 = scmp.eq.s32.totalorder %s23, 1
      %p104 = scmp.ne.s32.totalorder %s99, %s101
      %p105 = scmp.eq.s32.totalorder %s23, 0
      %p106 = por %p104, %p105
      %p107 = scmp.ne.s32.totalorder %s99, %s101
      %p108 = scmp.eq.s32.totalorder %s28, 1
      %p109 = por %p107, %p108
      %p110 = scmp.ne.s32.totalorder %s101, %s102
      %p111 = scmp.eq.s32.totalorder %s28, 0
      %p112 = por %p110, %p111
      %p113 = scmp.ne.s32.totalorder %s101, %s102
      %p114 = scmp.eq.s32.totalorder %s29, 1
      %p115 = por %p113, %p114
      %p117 = scmp.ne.s32.totalorder %s102, %s116
      %p118 = scmp.eq.s32.totalorder %s29, 0
      %p119 = por %p117, %p118
      %s121 = sadd.s32 %s120, 1
      %p124 = scmp.eq.s32.totalorder %s23, 1
      %p125 = scmp.ne.s32.totalorder %s120, %s122
      %p126 = scmp.eq.s32.totalorder %s23, 0
      %p127 = por %p125, %p126
      %p128 = scmp.ne.s32.totalorder %s120, %s122
      %p129 = scmp.eq.s32.totalorder %s28, 1
      %p130 = por %p128, %p129
      %p131 = scmp.ne.s32.totalorder %s122, %s123
      %p132 = scmp.eq.s32.totalorder %s28, 0
      %p133 = por %p131, %p132
      %p134 = scmp.ne.s32.totalorder %s122, %s123
      %p135 = scmp.eq.s32.totalorder %s29, 1
      %p136 = por %p134, %p135
      %p138 = scmp.ne.s32.totalorder %s123, %s137
      %p139 = scmp.eq.s32.totalorder %s29, 0
      %p140 = por %p138, %p139
      %s142 = sadd.s32 %s141, 1
      %p145 = scmp.eq.s32.totalorder %s23, 1
      %p146 = scmp.ne.s32.totalorder %s141, %s143
      %p147 = scmp.eq.s32.totalorder %s23, 0
      %p148 = por %p146, %p147
      %p149 = scmp.ne.s32.totalorder %s141, %s143
      %p150 = scmp.eq.s32.totalorder %s28, 1
      %p151 = por %p149, %p150
      %p152 = scmp.ne.s32.totalorder %s143, %s144
      %p153 = scmp.eq.s32.totalorder %s28, 0
      %p154 = por %p152, %p153
      %p155 = scmp.ne.s32.totalorder %s143, %s144
      %p156 = scmp.eq.s32.totalorder %s29, 1
      %p157 = por %p155, %p156
      %p159 = scmp.ne.s32.totalorder %s144, %s158
      %p160 = scmp.eq.s32.totalorder %s29, 0
      %p161 = por %p159, %p160
      %s163 = sadd.s32 %s162, 1
      %p166 = scmp.eq.s32.totalorder %s23, 1
      %p167 = scmp.ne.s32.totalorder %s162, %s164
      %p168 = scmp.eq.s32.totalorder %s23, 0
      %p169 = por %p167, %p168
      %p170 = scmp.ne.s32.totalorder %s162, %s164
      %p171 = scmp.eq.s32.totalorder %s28, 1
      %p172 = por %p170, %p171
      %p173 = scmp.ne.s32.totalorder %s164, %s165
      %p174 = scmp.eq.s32.totalorder %s28, 0
      %p175 = por %p173, %p174
      %p176 = scmp.ne.s32.totalorder %s164, %s165
      %p177 = scmp.eq.s32.totalorder %s29, 1
      %p178 = por %p176, %p177
      %p180 = scmp.ne.s32.totalorder %s165, %s179
      %p181 = scmp.eq.s32.totalorder %s29, 0
      %p182 = por %p180, %p181
      %s184 = sadd.s32 %s183, 1
      %p187 = scmp.eq.s32.totalorder %s23, 1
      %p188 = scmp.ne.s32.totalorder %s183, %s185
      %p189 = scmp.eq.s32.totalorder %s23, 0
      %p190 = por %p188, %p189
      %p191 = scmp.ne.s32.totalorder %s183, %s185
      %p192 = scmp.eq.s32.totalorder %s28, 1
      %p193 = por %p191, %p192
      %p194 = scmp.ne.s32.totalorder %s185, %s186
      %p195 = scmp.eq.s32.totalorder %s28, 0
      %p196 = por %p194, %p195
      %p197 = scmp.ne.s32.totalorder %s185, %s186
      %p198 = scmp.eq.s32.totalorder %s29, 1
      %p199 = por %p197, %p198
      %p201 = scmp.ne.s32.totalorder %s186, %s200
      %p202 = scmp.eq.s32.totalorder %s29, 0
      %p203 = por %p201, %p202
      %s205 = sadd.s32 %s204, 1
      %p208 = scmp.eq.s32.totalorder %s23, 1
      %p209 = scmp.ne.s32.totalorder %s204, %s206
      %p210 = scmp.eq.s32.totalorder %s23, 0
      %p211 = por %p209, %p210
      %p212 = scmp.ne.s32.totalorder %s204, %s206
      %p213 = scmp.eq.s32.totalorder %s28, 1
      %p214 = por %p212, %p213
      %p215 = scmp.ne.s32.totalorder %s206, %s207
      %p216 = scmp.eq.s32.totalorder %s28, 0
      %p217 = por %p215, %p216
      %p218 = scmp.ne.s32.totalorder %s206, %s207
      %p219 = scmp.eq.s32.totalorder %s29, 1
      %p220 = por %p218, %p219
      %p222 = scmp.ne.s32.totalorder %s207, %s221
      %p223 = scmp.eq.s32.totalorder %s29, 0
      %p224 = por %p222, %p223
      %s226 = sadd.s32 %s225, 1
      %p229 = scmp.eq.s32.totalorder %s23, 1
      %p230 = scmp.ne.s32.totalorder %s225, %s227
      %p231 = scmp.eq.s32.totalorder %s23, 0
      %p232 = por %p230, %p231
      %p233 = scmp.ne.s32.totalorder %s225, %s227
      %p234 = scmp.eq.s32.totalorder %s28, 1
      %p235 = por %p233, %p234
      %p236 = scmp.ne.s32.totalorder %s227, %s228
      %p237 = scmp.eq.s32.totalorder %s28, 0
      %p238 = por %p236, %p237
      %p239 = scmp.ne.s32.totalorder %s227, %s228
      %p240 = scmp.eq.s32.totalorder %s29, 1
      %p241 = por %p239, %p240
      %p243 = scmp.ne.s32.totalorder %s228, %s242
      %p244 = scmp.eq.s32.totalorder %s29, 0
      %p245 = por %p243, %p244
      %s247 = sadd.s32 %s246, 1
      %p250 = scmp.eq.s32.totalorder %s23, 1
      %p251 = scmp.ne.s32.totalorder %s246, %s248
      %p252 = scmp.eq.s32.totalorder %s23, 0
      %p253 = por %p251, %p252
      %p254 = scmp.ne.s32.totalorder %s246, %s248
      %p255 = scmp.eq.s32.totalorder %s28, 1
      %p256 = por %p254, %p255
      %p257 = scmp.ne.s32.totalorder %s248, %s249
      %p258 = scmp.eq.s32.totalorder %s28, 0
      %p259 = por %p257, %p258
      %p260 = scmp.ne.s32.totalorder %s248, %s249
      %p261 = scmp.eq.s32.totalorder %s29, 1
      %p262 = por %p260, %p261
      %p264 = scmp.ne.s32.totalorder %s249, %s263
      %p265 = scmp.eq.s32.totalorder %s29, 0
      %p266 = por %p264, %p265
      %s268 = sadd.s32 %s267, 1
      %p271 = scmp.eq.s32.totalorder %s23, 1
      %p272 = scmp.ne.s32.totalorder %s267, %s269
      %p273 = scmp.eq.s32.totalorder %s23, 0
      %p274 = por %p272, %p273
      %p275 = scmp.ne.s32.totalorder %s267, %s269
      %p276 = scmp.eq.s32.totalorder %s28, 1
      %p277 = por %p275, %p276
      %p278 = scmp.ne.s32.totalorder %s269, %s270
      %p279 = scmp.eq.s32.totalorder %s28, 0
      %p280 = por %p278, %p279
      %p281 = scmp.ne.s32.totalorder %s269, %s270
      %p282 = scmp.eq.s32.totalorder %s29, 1
      %p283 = por %p281, %p282
      %p285 = scmp.ne.s32.totalorder %s270, %s284
      %p286 = scmp.eq.s32.totalorder %s29, 0
      %p287 = por %p285, %p286
      %s289 = sadd.s32 %s288, 1
      %p292 = scmp.eq.s32.totalorder %s23, 1
      %p293 = scmp.ne.s32.totalorder %s288, %s290
      %p294 = scmp.eq.s32.totalorder %s23, 0
      %p295 = por %p293, %p294
      %p296 = scmp.ne.s32.totalorder %s288, %s290
      %p297 = scmp.eq.s32.totalorder %s28, 1
      %p298 = por %p296, %p297
      %p299 = scmp.ne.s32.totalorder %s290, %s291
      %p300 = scmp.eq.s32.totalorder %s28, 0
      %p301 = por %p299, %p300
      %p302 = scmp.ne.s32.totalorder %s290, %s291
      %p303 = scmp.eq.s32.totalorder %s29, 1
      %p304 = por %p302, %p303
      %p306 = scmp.ne.s32.totalorder %s291, %s305
      %p307 = scmp.eq.s32.totalorder %s29, 0
      %p308 = por %p306, %p307
      %s310 = sadd.s32 %s309, 1
      %p313 = scmp.eq.s32.totalorder %s23, 1
      %p314 = scmp.ne.s32.totalorder %s309, %s311
      %p315 = scmp.eq.s32.totalorder %s23, 0
      %p316 = por %p314, %p315
      %p317 = scmp.ne.s32.totalorder %s309, %s311
      %p318 = scmp.eq.s32.totalorder %s28, 1
      %p319 = por %p317, %p318
      %p320 = scmp.ne.s32.totalorder %s311, %s312
      %p321 = scmp.eq.s32.totalorder %s28, 0
      %p322 = por %p320, %p321
      %p323 = scmp.ne.s32.totalorder %s311, %s312
      %p324 = scmp.eq.s32.totalorder %s29, 1
      %p325 = por %p323, %p324
      %p327 = scmp.ne.s32.totalorder %s312, %s326
      %p328 = scmp.eq.s32.totalorder %s29, 0
      %p329 = por %p327, %p328
      %s330 = ssub.s32 %s23, %s30
      %p331 = scmp.eq.s32.totalorder %s330, 0
      %s333 = sadd.s32 %s332, 1
      %s334 = scalar_select %p331, %s332, %s333
      %p337 = pneg %p331
      %p338 = scmp.eq.s32.totalorder %s23, 1
      %p339 = por %p337, %p338
      %p340 = scmp.ne.s32.totalorder %s332, %s335
      %p341 = scmp.eq.s32.totalorder %s23, 0
      %p342 = por %p340, %p341
      %p343 = scmp.ne.s32.totalorder %s332, %s335
      %p344 = scmp.eq.s32.totalorder %s28, 1
      %p345 = por %p343, %p344
      %p346 = scmp.ne.s32.totalorder %s335, %s336
      %p347 = scmp.eq.s32.totalorder %s28, 0
      %p348 = por %p346, %p347
      %p349 = scmp.ne.s32.totalorder %s335, %s336
      %p350 = scmp.eq.s32.totalorder %s29, 1
      %p351 = por %p349, %p350
      %p353 = scmp.ne.s32.totalorder %s336, %s352
      %p354 = scmp.eq.s32.totalorder %s29, 0
      %p355 = por %p353, %p354
      %p356 = scmp.le.s32.totalorder 1, %s23
      %p357 = scmp.lt.s32.totalorder %s23, 3
      %p358 = pnand %p356, %p357
      %p359 = pneg %p358
      // Predicated region
      $region9: #{block_forward.1} parent=5 // pred_check
        _
      $region10: #{block_forward.1} parent=5 // pred_check_branch
        %361 = sbr.rel (%p358) target = $region12
      $region11: #{block_forward.1} parent=5 // pred_region
        %s362 = ssub.s32 %s23, 1
        // Predicated region
        $region13: #{block_forward.1} parent=11 // pred_check
          %p363 = pneg %p70
        $region14: #{block_forward.1} parent=11 // pred_check_branch
          %365 = sbr.rel (%p363) target = $region16
        $region15: #{block_forward.1} parent=11 // pred_region
          _
        $region16: #{block_forward.1} parent=11 // pred_fallthru
          _
        // Predicated region
        $region17: #{block_forward.1} parent=11 // pred_check
          %p366 = pneg %p91
        $region18: #{block_forward.1} parent=11 // pred_check_branch
          %368 = sbr.rel (%p366) target = $region20
        $region19: #{block_forward.1} parent=11 // pred_region
          %s370 = ssub.s32 1024, 1024
          %371 = vsyncadd [#allocation3], %s370
          %s372 = sshll.u32 [#allocation2], 4
          %s373 = int_to_ptr.vmem [resolvable:$true] %s372
          %378 = dma.hbm_to_vmem [thread:$0]  %s2, 1024, %s373, [#allocation3], 128, 128, 8
        $region20: #{block_forward.1} parent=11 // pred_fallthru
          _
        // Predicated region
        $region21: #{block_forward.1} parent=11 // pred_check
          %p379 = pneg %p112
        $region22: #{block_forward.1} parent=11 // pred_check_branch
          %381 = sbr.rel (%p379) target = $region24
        $region23: #{block_forward.1} parent=11 // pred_region
          %s383 = ssub.s32 16, 16
          %384 = vsyncadd [#allocation5], %s383
          %s386 = sshll.u32 [#allocation4], 4
          %s387 = int_to_ptr.vmem [resolvable:$true] %s386
          %389 = dma.hbm_to_vmem [thread:$0]  %s3, 16, %s387, [#allocation5]
        $region24: #{block_forward.1} parent=11 // pred_fallthru
          _
        // Predicated region
        $region25: #{block_forward.1} parent=11 // pred_check
          %p390 = pneg %p133
        $region26: #{block_forward.1} parent=11 // pred_check_branch
          %392 = sbr.rel (%p390) target = $region28
        $region27: #{block_forward.1} parent=11 // pred_region
          _
        $region28: #{block_forward.1} parent=11 // pred_fallthru
          _
        // Predicated region
        $region29: #{block_forward.1} parent=11 // pred_check
          %p393 = pneg %p154
        $region30: #{block_forward.1} parent=11 // pred_check_branch
          %395 = sbr.rel (%p393) target = $region32
        $region31: #{block_forward.1} parent=11 // pred_region
          _
        $region32: #{block_forward.1} parent=11 // pred_fallthru
          _
        // Predicated region
        $region33: #{block_forward.1} parent=11 // pred_check
          %p396 = pneg %p175
        $region34: #{block_forward.1} parent=11 // pred_check_branch
          %398 = sbr.rel (%p396) target = $region36
        $region35: #{block_forward.1} parent=11 // pred_region
          _
        $region36: #{block_forward.1} parent=11 // pred_fallthru
          _
        // Predicated region
        $region37: #{block_forward.1} parent=11 // pred_check
          %p399 = pneg %p196
        $region38: #{block_forward.1} parent=11 // pred_check_branch
          %401 = sbr.rel (%p399) target = $region40
        $region39: #{block_forward.1} parent=11 // pred_region
          _
        $region40: #{block_forward.1} parent=11 // pred_fallthru
          _
        // Predicated region
        $region41: #{block_forward.1} parent=11 // pred_check
          %p402 = pneg %p217
        $region42: #{block_forward.1} parent=11 // pred_check_branch
          %404 = sbr.rel (%p402) target = $region44
        $region43: #{block_forward.1} parent=11 // pred_region
          _
        $region44: #{block_forward.1} parent=11 // pred_fallthru
          _
        // Predicated region
        $region45: #{block_forward.1} parent=11 // pred_check
          %p405 = pneg %p238
        $region46: #{block_forward.1} parent=11 // pred_check_branch
          %407 = sbr.rel (%p405) target = $region48
        $region47: #{block_forward.1} parent=11 // pred_region
          _
        $region48: #{block_forward.1} parent=11 // pred_fallthru
          _
        // Predicated region
        $region49: #{block_forward.1} parent=11 // pred_check
          %p408 = pneg %p259
        $region50: #{block_forward.1} parent=11 // pred_check_branch
          %410 = sbr.rel (%p408) target = $region52
        $region51: #{block_forward.1} parent=11 // pred_region
          %s412 = ssub.s32 2048, 2048
          %413 = vsyncadd [#allocation5], %s412
          %s414 = sshll.u32 [#allocation6], 4
          %s415 = int_to_ptr.vmem [resolvable:$true] %s414
          %420 = dma.hbm_to_vmem [thread:$0]  %s10, 2048, %s415, [#allocation5], 128, 128, 8
        $region52: #{block_forward.1} parent=11 // pred_fallthru
          _
        // Predicated region
        $region53: #{block_forward.1} parent=11 // pred_check
          %p421 = pneg %p280
        $region54: #{block_forward.1} parent=11 // pred_check_branch
          %423 = sbr.rel (%p421) target = $region56
        $region55: #{block_forward.1} parent=11 // pred_region
          %s425 = ssub.s32 1024, 1024
          %426 = vsyncadd [#allocation8], %s425
          %s427 = sshll.u32 [#allocation7], 4
          %s428 = int_to_ptr.vmem [resolvable:$true] %s427
          %433 = dma.hbm_to_vmem [thread:$0]  %s11, 1024, %s428, [#allocation8], 128, 128, 8
        $region56: #{block_forward.1} parent=11 // pred_fallthru
          _
        // Predicated region
        $region57: #{block_forward.1} parent=11 // pred_check
          %p434 = pneg %p301
        $region58: #{block_forward.1} parent=11 // pred_check_branch
          %436 = sbr.rel (%p434) target = $region60
        $region59: #{block_forward.1} parent=11 // pred_region
          %s438 = ssub.s32 1024, 1024
          %439 = vsyncadd [#allocation8], %s438
          %s440 = sshll.u32 [#allocation9], 4
          %s441 = int_to_ptr.vmem [resolvable:$true] %s440
          %446 = dma.hbm_to_vmem [thread:$0]  %s12, 1024, %s441, [#allocation8], 128, 128, 8
        $region60: #{block_forward.1} parent=11 // pred_fallthru
          _
        // Predicated region
        $region61: #{block_forward.1} parent=11 // pred_check
          %p447 = pneg %p322
        $region62: #{block_forward.1} parent=11 // pred_check_branch
          %449 = sbr.rel (%p447) target = $region64
        $region63: #{block_forward.1} parent=11 // pred_region
          _
        $region64: #{block_forward.1} parent=11 // pred_fallthru
          _
      $region12: #{block_forward.1} parent=5 // pred_fallthru
        _
      %p450 = scmp.lt.s32.totalorder %s23, 2
      // Predicated region
      $region65: #{block_forward.1} parent=5 // pred_check
        %p451 = pneg %p450
      $region66: #{block_forward.1} parent=5 // pred_check_branch
        %453 = sbr.rel (%p451) target = $region68
      $region67: #{block_forward.1} parent=5 // pred_region
        // Predicated region
        $region69: #{block_forward.1} parent=67 // pred_check
          %p454 = pneg %p43
        $region70: #{block_forward.1} parent=67 // pred_check_branch
          %456 = sbr.rel (%p454) target = $region72
        $region71: #{block_forward.1} parent=67 // pred_region
          %s457 = smul.u32 2, %s23
          %p458 = scmp.lt.s32.totalorder %s457, 3
          %s459 = scalar_select %p458, %s457, 3
          %s460 = smul.addr %s459, 8
          %s461 = scalar_lea.vmem %s0, %s460
          %s462 = smul.u32 2, %s23
        $region72: #{block_forward.1} parent=67 // pred_fallthru
          _
      $region68: #{block_forward.1} parent=5 // pred_fallthru
        _
      %p463 = scmp.le.s32.totalorder 1, %s23
      %p464 = scmp.lt.s32.totalorder %s23, 3
      %p465 = pnand %p463, %p464
      %p466 = pneg %p465
      // Predicated region
      $region73: #{block_forward.1} parent=5 // pred_check
        _
      $region74: #{block_forward.1} parent=5 // pred_check_branch
        %468 = sbr.rel (%p465) target = $region76
      $region75: #{block_forward.1} parent=5 // pred_region
        %s469 = ssub.s32 %s23, 1
        // Predicated region
        $region77: #{block_forward.1} parent=75 // pred_check
          %p470 = pneg %p91
        $region78: #{block_forward.1} parent=75 // pred_check_branch
          %472 = sbr.rel (%p470) target = $region80
        $region79: #{block_forward.1} parent=75 // pred_region
          %473 = dma.done [#allocation3], 1024
        $region80: #{block_forward.1} parent=75 // pred_fallthru
          _
        // Predicated region
        $region81: #{block_forward.1} parent=75 // pred_check
          %p474 = pneg %p112
        $region82: #{block_forward.1} parent=75 // pred_check_branch
          %476 = sbr.rel (%p474) target = $region84
        $region83: #{block_forward.1} parent=75 // pred_region
          %477 = dma.done [#allocation5], 16
        $region84: #{block_forward.1} parent=75 // pred_fallthru
          _
        // Predicated region
        $region85: #{block_forward.1} parent=75 // pred_check
          %p478 = pneg %p259
        $region86: #{block_forward.1} parent=75 // pred_check_branch
          %480 = sbr.rel (%p478) target = $region88
        $region87: #{block_forward.1} parent=75 // pred_region
          %481 = dma.done [#allocation5], 2048
        $region88: #{block_forward.1} parent=75 // pred_fallthru
          _
        // Predicated region
        $region89: #{block_forward.1} parent=75 // pred_check
          %p482 = pneg %p280
        $region90: #{block_forward.1} parent=75 // pred_check_branch
          %484 = sbr.rel (%p482) target = $region92
        $region91: #{block_forward.1} parent=75 // pred_region
          %485 = dma.done [#allocation8], 1024
        $region92: #{block_forward.1} parent=75 // pred_fallthru
          _
        // Predicated region
        $region93: #{block_forward.1} parent=75 // pred_check
          %p486 = pneg %p301
        $region94: #{block_forward.1} parent=75 // pred_check_branch
          %488 = sbr.rel (%p486) target = $region96
        $region95: #{block_forward.1} parent=75 // pred_region
          %489 = dma.done [#allocation8], 1024
        $region96: #{block_forward.1} parent=75 // pred_fallthru
          _
        %s490 = smul.u32 2, %s28
        %p491 = scmp.lt.s32.totalorder %s490, 3
        %s492 = scalar_select %p491, %s490, 3
        %s493 = smul.addr %s492, 8
        %s494 = scalar_lea.vmem %s0, %s493
        %p495 = pneg %p49
        %p496 = pneg %p46
        %p497 = pneg %p70
        %p498 = pneg %p67
        %p499 = pneg %p91
        %p500 = pneg %p88
        %p501 = pneg %p112
        %p502 = pneg %p109
        %p503 = pneg %p133
        %p504 = pneg %p130
        %p505 = pneg %p154
        %p506 = pneg %p151
        %p507 = pneg %p175
        %p508 = pneg %p172
        %p509 = pneg %p196
        %p510 = pneg %p193
        %p511 = pneg %p217
        %p512 = pneg %p214
        %p513 = pneg %p238
        %p514 = pneg %p235
        %p515 = pneg %p259
        %p516 = pneg %p256
        %p517 = pneg %p280
        %p518 = pneg %p277
        %p519 = pneg %p301
        %p520 = pneg %p298
        %p521 = pneg %p322
        %p522 = pneg %p319
        %p523 = pneg %p348
        %p524 = pneg %p345
        %p525 = scmp.lt.s32.totalorder %s28, 1
        %s526 = scalar_select %p525, %s28, 1
        %s527 = smul.addr %s526, 4
        %s528 = scalar_lea.vmem %s14, %s527
        %s529 = smul.u32 2, %s28
        %p530 = scmp.lt.s32.totalorder %s529, 3
        %s531 = scalar_select %p530, %s529, 3
        %s532 = smul.addr %s531, 8
        %s533 = scalar_lea.vmem %s0, %s532
        %s534 = smul.u32 2, %s28
        %p535 = scmp.lt.s32.totalorder %s28, 1
        %s536 = scalar_select %p535, %s28, 1
        %s537 = smul.addr %s536, 4
        %s538 = scalar_lea.vmem %s14, %s537
        %v539 = vld [vmem:[%s533] sm:$0xff]
        %v540 = vld [vmem:[%s533 + $0x8] sm:$0xff]
        %v541 = vmax.f32 %v539, 0.0
        %v542 = vmax.f32 %v540, 0.0
        %v543 = vlaneseq
        %v544 = vshrl.u32 %v543, 7
        %v545 = vadd.s32 %v544, 8
        %v546 = vlaneseq
        %v547 = vand.u32 %v546, 127
        %vm548 = vcmp.eq.s32.totalorder %v544, 0
        %vm549 = vcmp.eq.s32.totalorder %v545, 0
        %v550 = vrot.slane %v541, 7
        %v551 = vrot.slane %v542, 7
        %vm552 = vcmp.lt.s32.totalorder %v544, 1
        %v553 = vsel %vm552, %v550, %v551
        %v554 = vsel %vm552, %v551, %v550
        %v555 = vsel %vm548, 0.0, %v554
        %v556 = vsel %vm549, 0.0, %v553
        %vm557 = vcmp.eq.s32.totalorder %v544, 15
        %vm558 = vcmp.eq.s32.totalorder %v545, 15
        %v559 = vrot.slane %v541, 1
        %v560 = vrot.slane %v542, 1
        %vm561 = vcmp.lt.s32.totalorder %v544, 7
        %v562 = vsel %vm561, %v559, %v560
        %v563 = vsel %vm561, %v560, %v559
        %v564 = vsel %vm557, 0.0, %v562
        %v565 = vsel %vm558, 0.0, %v563
        %vm566 = vcmp.lt.s32.totalorder %v547, 4
        %vm567 = vcmask 1048064
        %568 = vrot.lane.b32.xlu0 %v555, 64
        %v569 = vpop.permute.xlu0 %568
        %v570 = vsel %vm567, %v569, %v555
        %571 = vrot.lane.b32.xlu0 %v556, 64
        %v572 = vpop.permute.xlu0 %571
        %v573 = vsel %vm567, %v572, %v556
        %574 = vrot.lane.b32.xlu0 %v570, 64
        %v575 = vpop.permute.xlu0 %574
        %576 = vrot.lane.b32.xlu0 %v573, 64
        %v577 = vpop.permute.xlu0 %576
        %v578 = vsel %vm567, %v575, %v555
        %v579 = vsel %vm567, %v577, %v556
        %582 = vrot.lane.b32.xlu0 %v578, 68
        %v583 = vpop.permute.xlu0 %582
        %584 = vrot.lane.b32.xlu0 %v579, 68
        %v585 = vpop.permute.xlu0 %584
        %v588 = vsel %vm566, 0.0, %v583
        %v589 = vsel %vm566, 0.0, %v585
        %vm590 = vcmp.ge.s32.totalorder %v547, 60
        %591 = vrot.lane.b32.xlu0 %v578, 124
        %v592 = vpop.permute.xlu0 %591
        %593 = vrot.lane.b32.xlu0 %v579, 124
        %v594 = vpop.permute.xlu0 %593
        %v597 = vsel %vm590, 0.0, %v592
        %v598 = vsel %vm590, 0.0, %v594
        %v599 = vld [vmem:[%s1] sm:$0xff]
        %v600 = vld [vmem:[%s1 + $0x8] sm:$0xff]
        %v601 = vmul.f32 %v588, %v599
        %v602 = vmul.f32 %v589, %v600
        %s603 = scalar_lea.vmem %s1, 16
        %v604 = vld [vmem:[%s603] sm:$0xff]
        %v605 = vld [vmem:[%s603 + $0x8] sm:$0xff]
        %v606 = vmul.f32 %v555, %v604
        %v607 = vmul.f32 %v556, %v605
        %v608 = vadd.f32 %v601, %v606
        %v609 = vadd.f32 %v602, %v607
        %s610 = scalar_lea.vmem %s1, 32
        %v611 = vld [vmem:[%s610] sm:$0xff]
        %v612 = vld [vmem:[%s610 + $0x8] sm:$0xff]
        %v613 = vmul.f32 %v597, %v611
        %v614 = vmul.f32 %v598, %v612
        %v615 = vadd.f32 %v608, %v613
        %v616 = vadd.f32 %v609, %v614
        %617 = vrot.lane.b32.xlu0 %v541, 64
        %v618 = vpop.permute.xlu0 %617
        %v619 = vsel %vm567, %v618, %v541
        %620 = vrot.lane.b32.xlu0 %v542, 64
        %v621 = vpop.permute.xlu0 %620
        %v622 = vsel %vm567, %v621, %v542
        %623 = vrot.lane.b32.xlu0 %v619, 64
        %v624 = vpop.permute.xlu0 %623
        %625 = vrot.lane.b32.xlu0 %v622, 64
        %v626 = vpop.permute.xlu0 %625
        %v627 = vsel %vm567, %v624, %v541
        %v628 = vsel %vm567, %v626, %v542
        %631 = vrot.lane.b32.xlu0 %v627, 68
        %v632 = vpop.permute.xlu0 %631
        %633 = vrot.lane.b32.xlu0 %v628, 68
        %v634 = vpop.permute.xlu0 %633
        %v637 = vsel %vm566, 0.0, %v632
        %v638 = vsel %vm566, 0.0, %v634
        %639 = vrot.lane.b32.xlu0 %v627, 124
        %v640 = vpop.permute.xlu0 %639
        %641 = vrot.lane.b32.xlu0 %v628, 124
        %v642 = vpop.permute.xlu0 %641
        %v645 = vsel %vm590, 0.0, %v640
        %v646 = vsel %vm590, 0.0, %v642
        %s647 = scalar_lea.vmem %s1, 48
        %v648 = vld [vmem:[%s647] sm:$0xff]
        %v649 = vld [vmem:[%s647 + $0x8] sm:$0xff]
        %v650 = vmul.f32 %v637, %v648
        %v651 = vmul.f32 %v638, %v649
        %v652 = vadd.f32 %v615, %v650
        %v653 = vadd.f32 %v616, %v651
        %s654 = scalar_lea.vmem %s1, 64
        %v655 = vld [vmem:[%s654] sm:$0xff]
        %v656 = vld [vmem:[%s654 + $0x8] sm:$0xff]
        %v657 = vmul.f32 %v541, %v655
        %v658 = vmul.f32 %v542, %v656
        %v659 = vadd.f32 %v652, %v657
        %v660 = vadd.f32 %v653, %v658
        %s661 = scalar_lea.vmem %s1, 80
        %v662 = vld [vmem:[%s661] sm:$0xff]
        %v663 = vld [vmem:[%s661 + $0x8] sm:$0xff]
        %v664 = vmul.f32 %v645, %v662
        %v665 = vmul.f32 %v646, %v663
        %v666 = vadd.f32 %v659, %v664
        %v667 = vadd.f32 %v660, %v665
        %668 = vrot.lane.b32.xlu0 %v564, 64
        %v669 = vpop.permute.xlu0 %668
        %v670 = vsel %vm567, %v669, %v564
        %671 = vrot.lane.b32.xlu0 %v565, 64
        %v672 = vpop.permute.xlu0 %671
        %v673 = vsel %vm567, %v672, %v565
        %674 = vrot.lane.b32.xlu0 %v670, 64
        %v675 = vpop.permute.xlu0 %674
        %676 = vrot.lane.b32.xlu0 %v673, 64
        %v677 = vpop.permute.xlu0 %676
        %v678 = vsel %vm567, %v675, %v564
        %v679 = vsel %vm567, %v677, %v565
        %682 = vrot.lane.b32.xlu0 %v678, 68
        %v683 = vpop.permute.xlu0 %682
        %684 = vrot.lane.b32.xlu0 %v679, 68
        %v685 = vpop.permute.xlu0 %684
        %v688 = vsel %vm566, 0.0, %v683
        %v689 = vsel %vm566, 0.0, %v685
        %690 = vrot.lane.b32.xlu0 %v678, 124
        %v691 = vpop.permute.xlu0 %690
        %692 = vrot.lane.b32.xlu0 %v679, 124
        %v693 = vpop.permute.xlu0 %692
        %v696 = vsel %vm590, 0.0, %v691
        %v697 = vsel %vm590, 0.0, %v693
        %s698 = scalar_lea.vmem %s1, 96
        %v699 = vld [vmem:[%s698] sm:$0xff]
        %v700 = vld [vmem:[%s698 + $0x8] sm:$0xff]
        %v701 = vmul.f32 %v688, %v699
        %v702 = vmul.f32 %v689, %v700
        %v703 = vadd.f32 %v666, %v701
        %v704 = vadd.f32 %v667, %v702
        %s705 = scalar_lea.vmem %s1, 112
        %v706 = vld [vmem:[%s705] sm:$0xff]
        %v707 = vld [vmem:[%s705 + $0x8] sm:$0xff]
        %v708 = vmul.f32 %v564, %v706
        %v709 = vmul.f32 %v565, %v707
        %v710 = vadd.f32 %v703, %v708
        %v711 = vadd.f32 %v704, %v709
        %s712 = scalar_lea.vmem %s1, 128
        %v713 = vld [vmem:[%s712] sm:$0xff]
        %v714 = vld [vmem:[%s712 + $0x8] sm:$0xff]
        %v715 = vmul.f32 %v696, %v713
        %v716 = vmul.f32 %v697, %v714
        %v717 = vadd.f32 %v710, %v715
        %v718 = vadd.f32 %v711, %v716
        %v719 = vld [vmem:[#allocation2] sm:$0xff]
        %v720 = vld [vmem:[#allocation2 + $0x8] sm:$0xff]
        %v721 = vld [vmem:[#allocation2 + $0x10] sm:$0xff]
        %v722 = vld [vmem:[#allocation2 + $0x18] sm:$0xff]
        %v723 = vld [vmem:[#allocation2 + $0x20] sm:$0xff]
        %v724 = vld [vmem:[#allocation2 + $0x28] sm:$0xff]
        %v725 = vld [vmem:[#allocation2 + $0x30] sm:$0xff]
        %v726 = vld [vmem:[#allocation2 + $0x38] sm:$0xff]
        %v727 = vld [vmem:[#allocation4] sm:$0x1]
        %v729 = vlaneseq
        %v730 = vshrl.u32 %v729, 7
        %v731 = vsub.s32 0, %v730
        %v732 = vrot.slane %v727, %v731
        %vm734 = vcmask 523264
        %v736 = vsel %vm734, %v717, 0
        %v739 = vsel %vm734, %v718, 0
        %741 = vmatprep.subr.mxu0 0.0
        %742 = vmatpush1.msra.mxu0 %v719
        %743 = vmatprep.subr.mxu0 0.0
        %744 = vmatpush1.msra.mxu0 %v720
        %745 = vmatprep.subr.mxu0 0.0
        %746 = vmatpush1.msra.mxu0 %v721
        %747 = vmatprep.subr.mxu0 0.0
        %748 = vmatpush1.msra.mxu0 %v722
        %749 = vmatprep.subr.mxu0 0.0
        %750 = vmatpush1.msra.mxu0 %v723
        %751 = vmatprep.subr.mxu0 0.0
        %752 = vmatpush1.msra.mxu0 %v724
        %753 = vmatprep.subr.mxu0 0.0
        %754 = vmatpush1.msra.mxu0 %v725
        %755 = vmatprep.subr.mxu0 0.0
        %756 = vmatpush1.msra.mxu0 %v726
        %757 = vmatprep.subr.mxu0 0.0
        %758 = vmatpush1.msra.mxu0 0.0
        %759 = vmatprep.subr.mxu0 0.0
        %760 = vmatpush1.msra.mxu0 0.0
        %761 = vmatprep.subr.mxu0 0.0
        %762 = vmatpush1.msra.mxu0 0.0
        %763 = vmatprep.subr.mxu0 0.0
        %764 = vmatpush1.msra.mxu0 0.0
        %765 = vmatprep.subr.mxu0 0.0
        %766 = vmatpush1.msra.mxu0 0.0
        %767 = vmatprep.subr.mxu0 0.0
        %768 = vmatpush1.msra.mxu0 0.0
        %769 = vmatprep.subr.mxu0 0.0
        %770 = vmatpush1.msra.mxu0 0.0
        %771 = vmatprep.subr.mxu0 0.0
        %772 = vmatpush1.msra.mxu0 0.0
        %773 = vmatprep.subr.mxu0 0.0
        %774 = vmatpush1.msra.mxu0 0.0
        %775 = vmatprep.subr.mxu0 0.0
        %776 = vmatpush1.msra.mxu0 0.0
        %777 = vmatprep.subr.mxu0 0.0
        %778 = vmatpush1.msra.mxu0 0.0
        %779 = vmatprep.subr.mxu0 0.0
        %780 = vmatpush1.msra.mxu0 0.0
        %781 = vmatprep.subr.mxu0 0.0
        %782 = vmatpush1.msra.mxu0 0.0
        %783 = vmatprep.subr.mxu0 0.0
        %784 = vmatpush1.msra.mxu0 0.0
        %785 = vmatprep.subr.mxu0 0.0
        %786 = vmatpush1.msra.mxu0 0.0
        %787 = vmatprep.subr.mxu0 0.0
        %788 = vmatpush1.msra.mxu0 0.0
        %789 = vmatprep.subr.mxu0 0.0
        %790 = vmatpush1.msra.mxu0 0.0
        %791 = vmatprep.subr.mxu0 0.0
        %792 = vmatpush1.msra.mxu0 0.0
        %793 = vmatprep.subr.mxu0 0.0
        %794 = vmatpush1.msra.mxu0 0.0
        %795 = vmatprep.subr.mxu0 0.0
        %796 = vmatpush1.msra.mxu0 0.0
        %797 = vmatprep.subr.mxu0 0.0
        %798 = vmatpush1.msra.mxu0 0.0
        %799 = vmatprep.subr.mxu0 0.0
        %800 = vmatpush1.msra.mxu0 0.0
        %801 = vmatprep.subr.mxu0 0.0
        %802 = vmatpush1.msra.mxu0 0.0
        %803 = vmatprep.subr.mxu0 0.0
        %804 = vmatpush1.msra.mxu0 0.0
        %805 = vmatprep.mubr.f32.mxu0 0.0
        %806 = vmatmul.mubr.f32.gmra.mrb[0].mxu0 %v736
        %v807 = vpop.f32.mrb[0].mxu0
        %v808 = vadd.f32 %v732, %v807
        %v809 = vpop.f32.mrb[0].mxu0
        %810 = vmatprep.mubr.f32.mxu0 0.0
        %811 = vmatmul.mubr.f32.gmra.mrb[0].mxu0 %v739
        %v812 = vpop.f32.mrb[0].mxu0
        %v813 = vadd.f32 %v732, %v812
        %v814 = vpop.f32.mrb[0].mxu0
        %815 = vdwg.mxu0
        %v816 = vmax.f32 %v808, 0.0
        %v817 = vmax.f32 %v813, 0.0
        %v818 = vrot.slane %v816, 7
        %v819 = vrot.slane %v817, 7
        %v820 = vsel %vm552, %v818, %v819
        %v821 = vsel %vm552, %v819, %v818
        %v822 = vsel %vm548, 0.0, %v821
        %v823 = vsel %vm549, 0.0, %v820
        %v824 = vrot.slane %v816, 1
        %v825 = vrot.slane %v817, 1
        %v826 = vsel %vm561, %v824, %v825
        %v827 = vsel %vm561, %v825, %v824
        %v828 = vsel %vm557, 0.0, %v826
        %v829 = vsel %vm558, 0.0, %v827
        %vm830 = vcmp.lt.s32.totalorder %v547, 8
        %831 = vrot.lane.b32.xlu0 %v822, 8
        %v832 = vpop.permute.xlu0 %831
        %833 = vrot.lane.b32.xlu0 %v823, 8
        %v834 = vpop.permute.xlu0 %833
        %v835 = vsel %vm830, 0.0, %v832
        %v836 = vsel %vm830, 0.0, %v834
        %vm837 = vcmp.ge.s32.totalorder %v547, 120
        %838 = vrot.lane.b32.xlu0 %v822, 120
        %v839 = vpop.permute.xlu0 %838
        %840 = vrot.lane.b32.xlu0 %v823, 120
        %v841 = vpop.permute.xlu0 %840
        %v842 = vsel %vm837, 0.0, %v839
        %v843 = vsel %vm837, 0.0, %v841
        %v844 = vld [vmem:[%s4] sm:$0xff]
        %v845 = vld [vmem:[%s4 + $0x8] sm:$0xff]
        %v846 = vmul.f32 %v835, %v844
        %v847 = vmul.f32 %v836, %v845
        %s848 = scalar_lea.vmem %s4, 16
        %v849 = vld [vmem:[%s848] sm:$0xff]
        %v850 = vld [vmem:[%s848 + $0x8] sm:$0xff]
        %v851 = vmul.f32 %v822, %v849
        %v852 = vmul.f32 %v823, %v850
        %v853 = vadd.f32 %v846, %v851
        %v854 = vadd.f32 %v847, %v852
        %s855 = scalar_lea.vmem %s4, 32
        %v856 = vld [vmem:[%s855] sm:$0xff]
        %v857 = vld [vmem:[%s855 + $0x8] sm:$0xff]
        %v858 = vmul.f32 %v842, %v856
        %v859 = vmul.f32 %v843, %v857
        %v860 = vadd.f32 %v853, %v858
        %v861 = vadd.f32 %v854, %v859
        %862 = vrot.lane.b32.xlu0 %v816, 8
        %v863 = vpop.permute.xlu0 %862
        %864 = vrot.lane.b32.xlu0 %v817, 8
        %v865 = vpop.permute.xlu0 %864
        %v866 = vsel %vm830, 0.0, %v863
        %v867 = vsel %vm830, 0.0, %v865
        %868 = vrot.lane.b32.xlu0 %v816, 120
        %v869 = vpop.permute.xlu0 %868
        %870 = vrot.lane.b32.xlu0 %v817, 120
        %v871 = vpop.permute.xlu0 %870
        %v872 = vsel %vm837, 0.0, %v869
        %v873 = vsel %vm837, 0.0, %v871
        %s874 = scalar_lea.vmem %s4, 48
        %v875 = vld [vmem:[%s874] sm:$0xff]
        %v876 = vld [vmem:[%s874 + $0x8] sm:$0xff]
        %v877 = vmul.f32 %v866, %v875
        %v878 = vmul.f32 %v867, %v876
        %v879 = vadd.f32 %v860, %v877
        %v880 = vadd.f32 %v861, %v878
        %s881 = scalar_lea.vmem %s4, 64
        %v882 = vld [vmem:[%s881] sm:$0xff]
        %v883 = vld [vmem:[%s881 + $0x8] sm:$0xff]
        %v884 = vmul.f32 %v816, %v882
        %v885 = vmul.f32 %v817, %v883
        %v886 = vadd.f32 %v879, %v884
        %v887 = vadd.f32 %v880, %v885
        %s888 = scalar_lea.vmem %s4, 80
        %v889 = vld [vmem:[%s888] sm:$0xff]
        %v890 = vld [vmem:[%s888 + $0x8] sm:$0xff]
        %v891 = vmul.f32 %v872, %v889
        %v892 = vmul.f32 %v873, %v890
        %v893 = vadd.f32 %v886, %v891
        %v894 = vadd.f32 %v887, %v892
        %895 = vrot.lane.b32.xlu0 %v828, 8
        %v896 = vpop.permute.xlu0 %895
        %897 = vrot.lane.b32.xlu0 %v829, 8
        %v898 = vpop.permute.xlu0 %897
        %v899 = vsel %vm830, 0.0, %v896
        %v900 = vsel %vm830, 0.0, %v898
        %901 = vrot.lane.b32.xlu0 %v828, 120
        %v902 = vpop.permute.xlu0 %901
        %903 = vrot.lane.b32.xlu0 %v829, 120
        %v904 = vpop.permute.xlu0 %903
        %v905 = vsel %vm837, 0.0, %v902
        %v906 = vsel %vm837, 0.0, %v904
        %s907 = scalar_lea.vmem %s4, 96
        %v908 = vld [vmem:[%s907] sm:$0xff]
        %v909 = vld [vmem:[%s907 + $0x8] sm:$0xff]
        %v910 = vmul.f32 %v899, %v908
        %v911 = vmul.f32 %v900, %v909
        %v912 = vadd.f32 %v893, %v910
        %v913 = vadd.f32 %v894, %v911
        %s914 = scalar_lea.vmem %s4, 112
        %v915 = vld [vmem:[%s914] sm:$0xff]
        %v916 = vld [vmem:[%s914 + $0x8] sm:$0xff]
        %v917 = vmul.f32 %v828, %v915
        %v918 = vmul.f32 %v829, %v916
        %v919 = vadd.f32 %v912, %v917
        %v920 = vadd.f32 %v913, %v918
        %s921 = scalar_lea.vmem %s4, 128
        %v922 = vld [vmem:[%s921] sm:$0xff]
        %v923 = vld [vmem:[%s921 + $0x8] sm:$0xff]
        %v924 = vmul.f32 %v905, %v922
        %v925 = vmul.f32 %v906, %v923
        %v926 = vadd.f32 %v919, %v924
        %v927 = vadd.f32 %v920, %v925
        %v928 = vld [vmem:[%s5] sm:$0xff]
        %v929 = vld [vmem:[%s5 + $0x8] sm:$0xff]
        %v930 = vld [vmem:[%s5 + $0x10] sm:$0xff]
        %v931 = vld [vmem:[%s5 + $0x18] sm:$0xff]
        %v932 = vld [vmem:[%s5 + $0x20] sm:$0xff]
        %v933 = vld [vmem:[%s5 + $0x28] sm:$0xff]
        %v934 = vld [vmem:[%s5 + $0x30] sm:$0xff]
        %v935 = vld [vmem:[%s5 + $0x38] sm:$0xff]
        %v936 = vld [vmem:[%s5 + $0x40] sm:$0xff]
        %v937 = vld [vmem:[%s5 + $0x48] sm:$0xff]
        %v938 = vld [vmem:[%s5 + $0x50] sm:$0xff]
        %v939 = vld [vmem:[%s5 + $0x58] sm:$0xff]
        %v940 = vld [vmem:[%s5 + $0x60] sm:$0xff]
        %v941 = vld [vmem:[%s5 + $0x68] sm:$0xff]
        %v942 = vld [vmem:[%s5 + $0x70] sm:$0xff]
        %v943 = vld [vmem:[%s5 + $0x78] sm:$0xff]
        %v944 = vld [vmem:[%s6] sm:$0x1]
        %v946 = vlaneseq
        %v947 = vshrl.u32 %v946, 7
        %v948 = vsub.s32 0, %v947
        %v949 = vrot.slane %v944, %v948
        %951 = vmatprep.subr.mxu0 0.0
        %952 = vmatpush1.msra.mxu0 %v928
        %953 = vmatprep.subr.mxu0 0.0
        %954 = vmatpush1.msra.mxu0 %v929
        %955 = vmatprep.subr.mxu0 0.0
        %956 = vmatpush1.msra.mxu0 %v930
        %957 = vmatprep.subr.mxu0 0.0
        %958 = vmatpush1.msra.mxu0 %v931
        %959 = vmatprep.subr.mxu0 0.0
        %960 = vmatpush1.msra.mxu0 %v932
        %961 = vmatprep.subr.mxu0 0.0
        %962 = vmatpush1.msra.mxu0 %v933
        %963 = vmatprep.subr.mxu0 0.0
        %964 = vmatpush1.msra.mxu0 %v934
        %965 = vmatprep.subr.mxu0 0.0
        %966 = vmatpush1.msra.mxu0 %v935
        %967 = vmatprep.subr.mxu0 0.0
        %968 = vmatpush1.msra.mxu0 %v936
        %969 = vmatprep.subr.mxu0 0.0
        %970 = vmatpush1.msra.mxu0 %v937
        %971 = vmatprep.subr.mxu0 0.0
        %972 = vmatpush1.msra.mxu0 %v938
        %973 = vmatprep.subr.mxu0 0.0
        %974 = vmatpush1.msra.mxu0 %v939
        %975 = vmatprep.subr.mxu0 0.0
        %976 = vmatpush1.msra.mxu0 %v940
        %977 = vmatprep.subr.mxu0 0.0
        %978 = vmatpush1.msra.mxu0 %v941
        %979 = vmatprep.subr.mxu0 0.0
        %980 = vmatpush1.msra.mxu0 %v942
        %981 = vmatprep.subr.mxu0 0.0
        %982 = vmatpush1.msra.mxu0 %v943
        %983 = vmatprep.subr.mxu0 0.0
        %984 = vmatpush1.msra.mxu0 0.0
        %985 = vmatprep.subr.mxu0 0.0
        %986 = vmatpush1.msra.mxu0 0.0
        %987 = vmatprep.subr.mxu0 0.0
        %988 = vmatpush1.msra.mxu0 0.0
        %989 = vmatprep.subr.mxu0 0.0
        %990 = vmatpush1.msra.mxu0 0.0
        %991 = vmatprep.subr.mxu0 0.0
        %992 = vmatpush1.msra.mxu0 0.0
        %993 = vmatprep.subr.mxu0 0.0
        %994 = vmatpush1.msra.mxu0 0.0
        %995 = vmatprep.subr.mxu0 0.0
        %996 = vmatpush1.msra.mxu0 0.0
        %997 = vmatprep.subr.mxu0 0.0
        %998 = vmatpush1.msra.mxu0 0.0
        %999 = vmatprep.subr.mxu0 0.0
        %1000 = vmatpush1.msra.mxu0 0.0
        %1001 = vmatprep.subr.mxu0 0.0
        %1002 = vmatpush1.msra.mxu0 0.0
        %1003 = vmatprep.subr.mxu0 0.0
        %1004 = vmatpush1.msra.mxu0 0.0
        %1005 = vmatprep.subr.mxu0 0.0
        %1006 = vmatpush1.msra.mxu0 0.0
        %1007 = vmatprep.subr.mxu0 0.0
        %1008 = vmatpush1.msra.mxu0 0.0
        %1009 = vmatprep.subr.mxu0 0.0
        %1010 = vmatpush1.msra.mxu0 0.0
        %1011 = vmatprep.subr.mxu0 0.0
        %1012 = vmatpush1.msra.mxu0 0.0
        %1013 = vmatprep.subr.mxu0 0.0
        %1014 = vmatpush1.msra.mxu0 0.0
        %1015 = vmatprep.mubr.f32.mxu0 0.0
        %1016 = vmatmul.mubr.f32.gmra.mrb[0].mxu0 %v926
        %v1017 = vpop.f32.mrb[0].mxu0
        %v1018 = vadd.f32 %v949, %v1017
        %v1019 = vpop.f32.mrb[0].mxu0
        %1020 = vmatprep.mubr.f32.mxu0 0.0
        %1021 = vmatmul.mubr.f32.gmra.mrb[0].mxu0 %v927
        %v1022 = vpop.f32.mrb[0].mxu0
        %v1023 = vadd.f32 %v949, %v1022
        %v1024 = vpop.f32.mrb[0].mxu0
        %1025 = vdwg.mxu0
        %1026 = vrot.lane.b32.xlu0 %v1018, 8
        %v1027 = vpop.permute.xlu0 %1026
        %1028 = vrot.lane.b32.xlu0 %v1023, 8
        %v1029 = vpop.permute.xlu0 %1028
        %v1030 = vsel %vm830, -inf, %v1027
        %v1031 = vsel %vm830, -inf, %v1029
        %1032 = vrot.lane.b32.xlu0 %v1018, 120
        %v1033 = vpop.permute.xlu0 %1032
        %1034 = vrot.lane.b32.xlu0 %v1023, 120
        %v1035 = vpop.permute.xlu0 %1034
        %v1036 = vsel %vm837, -inf, %v1033
        %v1037 = vsel %vm837, -inf, %v1035
        %v1038 = vmax.f32 %v1030, %v1018
        %v1039 = vmax.f32 %v1031, %v1023
        %v1040 = vmax.f32 %v1038, %v1036
        %v1041 = vmax.f32 %v1039, %v1037
        %v1042 = vrot.slane %v1040, 7
        %v1043 = vrot.slane %v1041, 7
        %v1044 = vsel %vm552, %v1042, %v1043
        %v1045 = vsel %vm552, %v1043, %v1042
        %v1046 = vsel %vm548, -inf, %v1045
        %v1047 = vsel %vm549, -inf, %v1044
        %v1048 = vrot.slane %v1040, 1
        %v1049 = vrot.slane %v1041, 1
        %v1050 = vsel %vm561, %v1048, %v1049
        %v1051 = vsel %vm561, %v1049, %v1048
        %v1052 = vsel %vm557, -inf, %v1050
        %v1053 = vsel %vm558, -inf, %v1051
        %v1054 = vmax.f32 %v1046, %v1040
        %v1055 = vmax.f32 %v1047, %v1041
        %v1056 = vmax.f32 %v1054, %v1052
        %v1057 = vmax.f32 %v1055, %v1053
        %v1058 = vld [vmem:[%s7] sm:$0xf]
        %vm1059 = vcmask 130048
        %v1061 = vsel %vm1059, %v1058, 0
        %1063 = vmatprep.subr.mxu0 0.0
        %1064 = vmatpush1.msra.mxu0 %v1056
        %1065 = vmatprep.subr.mxu0 0.0
        %1066 = vmatpush1.msra.mxu0 %v1057
        %1067 = vmatprep.subr.mxu0 0.0
        %1068 = vmatpush1.msra.mxu0 0.0
        %1069 = vmatprep.subr.mxu0 0.0
        %1070 = vmatpush1.msra.mxu0 0.0
        %1071 = vmatprep.subr.mxu0 0.0
        %1072 = vmatpush1.msra.mxu0 0.0
        %1073 = vmatprep.subr.mxu0 0.0
        %1074 = vmatpush1.msra.mxu0 0.0
        %1075 = vmatprep.subr.mxu0 0.0
        %1076 = vmatpush1.msra.mxu0 0.0
        %1077 = vmatprep.subr.mxu0 0.0
        %1078 = vmatpush1.msra.mxu0 0.0
        %1079 = vmatprep.subr.mxu0 0.0
        %1080 = vmatpush1.msra.mxu0 0.0
        %1081 = vmatprep.subr.mxu0 0.0
        %1082 = vmatpush1.msra.mxu0 0.0
        %1083 = vmatprep.subr.mxu0 0.0
        %1084 = vmatpush1.msra.mxu0 0.0
        %1085 = vmatprep.subr.mxu0 0.0
        %1086 = vmatpush1.msra.mxu0 0.0
        %1087 = vmatprep.subr.mxu0 0.0
        %1088 = vmatpush1.msra.mxu0 0.0
        %1089 = vmatprep.subr.mxu0 0.0
        %1090 = vmatpush1.msra.mxu0 0.0
        %1091 = vmatprep.subr.mxu0 0.0
        %1092 = vmatpush1.msra.mxu0 0.0
        %1093 = vmatprep.subr.mxu0 0.0
        %1094 = vmatpush1.msra.mxu0 0.0
        %1095 = vmatprep.subr.mxu0 0.0
        %1096 = vmatpush1.msra.mxu0 0.0
        %1097 = vmatprep.subr.mxu0 0.0
        %1098 = vmatpush1.msra.mxu0 0.0
        %1099 = vmatprep.subr.mxu0 0.0
        %1100 = vmatpush1.msra.mxu0 0.0
        %1101 = vmatprep.subr.mxu0 0.0
        %1102 = vmatpush1.msra.mxu0 0.0
        %1103 = vmatprep.subr.mxu0 0.0
        %1104 = vmatpush1.msra.mxu0 0.0
        %1105 = vmatprep.subr.mxu0 0.0
        %1106 = vmatpush1.msra.mxu0 0.0
        %1107 = vmatprep.subr.mxu0 0.0
        %1108 = vmatpush1.msra.mxu0 0.0
        %1109 = vmatprep.subr.mxu0 0.0
        %1110 = vmatpush1.msra.mxu0 0.0
        %1111 = vmatprep.subr.mxu0 0.0
        %1112 = vmatpush1.msra.mxu0 0.0
        %1113 = vmatprep.subr.mxu0 0.0
        %1114 = vmatpush1.msra.mxu0 0.0
        %1115 = vmatprep.subr.mxu0 0.0
        %1116 = vmatpush1.msra.mxu0 0.0
        %1117 = vmatprep.subr.mxu0 0.0
        %1118 = vmatpush1.msra.mxu0 0.0
        %1119 = vmatprep.subr.mxu0 0.0
        %1120 = vmatpush1.msra.mxu0 0.0
        %1121 = vmatprep.subr.mxu0 0.0
        %1122 = vmatpush1.msra.mxu0 0.0
        %1123 = vmatprep.subr.mxu0 0.0
        %1124 = vmatpush1.msra.mxu0 0.0
        %1125 = vmatprep.subr.mxu0 0.0
        %1126 = vmatpush1.msra.mxu0 0.0
        %1127 = vmatprep.mubr.f32.mxu0 0.0
        %1128 = vmatmul.mubr.f32.gmra.mrb[0].mxu0 %v1061
        %v1129 = vpop.f32.mrb[0].mxu0
        %v1130 = vadd.f32 0.0, %v1129
        %v1131 = vpop.f32.mrb[0].mxu0
        %1132 = vdwg.mxu0
        %v1133 = vld [vmem:[%s8] sm:$0xf]
        %v1135 = vsel %vm1059, %v1133, 0
        %1137 = vmatprep.subr.mxu0 0.0
        %1138 = vmatpush1.msra.mxu0 %v1056
        %1139 = vmatprep.subr.mxu0 0.0
        %1140 = vmatpush1.msra.mxu0 %v1057
        %1141 = vmatprep.subr.mxu0 0.0
        %1142 = vmatpush1.msra.mxu0 0.0
        %1143 = vmatprep.subr.mxu0 0.0
        %1144 = vmatpush1.msra.mxu0 0.0
        %1145 = vmatprep.subr.mxu0 0.0
        %1146 = vmatpush1.msra.mxu0 0.0
        %1147 = vmatprep.subr.mxu0 0.0
        %1148 = vmatpush1.msra.mxu0 0.0
        %1149 = vmatprep.subr.mxu0 0.0
        %1150 = vmatpush1.msra.mxu0 0.0
        %1151 = vmatprep.subr.mxu0 0.0
        %1152 = vmatpush1.msra.mxu0 0.0
        %1153 = vmatprep.subr.mxu0 0.0
        %1154 = vmatpush1.msra.mxu0 0.0
        %1155 = vmatprep.subr.mxu0 0.0
        %1156 = vmatpush1.msra.mxu0 0.0
        %1157 = vmatprep.subr.mxu0 0.0
        %1158 = vmatpush1.msra.mxu0 0.0
        %1159 = vmatprep.subr.mxu0 0.0
        %1160 = vmatpush1.msra.mxu0 0.0
        %1161 = vmatprep.subr.mxu0 0.0
        %1162 = vmatpush1.msra.mxu0 0.0
        %1163 = vmatprep.subr.mxu0 0.0
        %1164 = vmatpush1.msra.mxu0 0.0
        %1165 = vmatprep.subr.mxu0 0.0
        %1166 = vmatpush1.msra.mxu0 0.0
        %1167 = vmatprep.subr.mxu0 0.0
        %1168 = vmatpush1.msra.mxu0 0.0
        %1169 = vmatprep.subr.mxu0 0.0
        %1170 = vmatpush1.msra.mxu0 0.0
        %1171 = vmatprep.subr.mxu0 0.0
        %1172 = vmatpush1.msra.mxu0 0.0
        %1173 = vmatprep.subr.mxu0 0.0
        %1174 = vmatpush1.msra.mxu0 0.0
        %1175 = vmatprep.subr.mxu0 0.0
        %1176 = vmatpush1.msra.mxu0 0.0
        %1177 = vmatprep.subr.mxu0 0.0
        %1178 = vmatpush1.msra.mxu0 0.0
        %1179 = vmatprep.subr.mxu0 0.0
        %1180 = vmatpush1.msra.mxu0 0.0
        %1181 = vmatprep.subr.mxu0 0.0
        %1182 = vmatpush1.msra.mxu0 0.0
        %1183 = vmatprep.subr.mxu0 0.0
        %1184 = vmatpush1.msra.mxu0 0.0
        %1185 = vmatprep.subr.mxu0 0.0
        %1186 = vmatpush1.msra.mxu0 0.0
        %1187 = vmatprep.subr.mxu0 0.0
        %1188 = vmatpush1.msra.mxu0 0.0
        %1189 = vmatprep.subr.mxu0 0.0
        %1190 = vmatpush1.msra.mxu0 0.0
        %1191 = vmatprep.subr.mxu0 0.0
        %1192 = vmatpush1.msra.mxu0 0.0
        %1193 = vmatprep.subr.mxu0 0.0
        %1194 = vmatpush1.msra.mxu0 0.0
        %1195 = vmatprep.subr.mxu0 0.0
        %1196 = vmatpush1.msra.mxu0 0.0
        %1197 = vmatprep.subr.mxu0 0.0
        %1198 = vmatpush1.msra.mxu0 0.0
        %1199 = vmatprep.subr.mxu0 0.0
        %1200 = vmatpush1.msra.mxu0 0.0
        %1201 = vmatprep.mubr.f32.mxu0 0.0
        %1202 = vmatmul.mubr.f32.gmra.mrb[0].mxu0 %v1135
        %v1203 = vpop.f32.mrb[0].mxu0
        %v1204 = vadd.f32 0.0, %v1203
        %v1205 = vpop.f32.mrb[0].mxu0
        %1206 = vdwg.mxu0
        %v1207 = vld [vmem:[%s9] sm:$0xff]
        %v1208 = vld [vmem:[%s9 + $0x8] sm:$0xff]
        %v1209 = vld [vmem:[%s9 + $0x10] sm:$0xff]
        %v1210 = vld [vmem:[%s9 + $0x18] sm:$0xff]
        %v1211 = vld [vmem:[%s9 + $0x20] sm:$0xff]
        %v1212 = vld [vmem:[%s9 + $0x28] sm:$0xff]
        %v1213 = vld [vmem:[%s9 + $0x30] sm:$0xff]
        %v1214 = vld [vmem:[%s9 + $0x38] sm:$0xff]
        %v1215 = vld [vmem:[%s9 + $0x40] sm:$0xff]
        %v1216 = vld [vmem:[%s9 + $0x48] sm:$0xff]
        %v1217 = vld [vmem:[%s9 + $0x50] sm:$0xff]
        %v1218 = vld [vmem:[%s9 + $0x58] sm:$0xff]
        %v1219 = vld [vmem:[%s9 + $0x60] sm:$0xff]
        %v1220 = vld [vmem:[%s9 + $0x68] sm:$0xff]
        %v1221 = vld [vmem:[%s9 + $0x70] sm:$0xff]
        %v1222 = vld [vmem:[%s9 + $0x78] sm:$0xff]
        %v1223 = vld [vmem:[#allocation6] sm:$0xff]
        %v1224 = vld [vmem:[#allocation6 + $0x8] sm:$0xff]
        %v1225 = vld [vmem:[#allocation6 + $0x10] sm:$0xff]
        %v1226 = vld [vmem:[#allocation6 + $0x18] sm:$0xff]
        %v1227 = vld [vmem:[#allocation6 + $0x20] sm:$0xff]
        %v1228 = vld [vmem:[#allocation6 + $0x28] sm:$0xff]
        %v1229 = vld [vmem:[#allocation6 + $0x30] sm:$0xff]
        %v1230 = vld [vmem:[#allocation6 + $0x38] sm:$0xff]
        %v1231 = vld [vmem:[#allocation6 + $0x40] sm:$0xff]
        %v1232 = vld [vmem:[#allocation6 + $0x48] sm:$0xff]
        %v1233 = vld [vmem:[#allocation6 + $0x50] sm:$0xff]
        %v1234 = vld [vmem:[#allocation6 + $0x58] sm:$0xff]
        %v1235 = vld [vmem:[#allocation6 + $0x60] sm:$0xff]
        %v1236 = vld [vmem:[#allocation6 + $0x68] sm:$0xff]
        %v1237 = vld [vmem:[#allocation6 + $0x70] sm:$0xff]
        %v1238 = vld [vmem:[#allocation6 + $0x78] sm:$0xff]
        %1239 = vmatprep.subr.mxu0 0.0
        %1240 = vmatpush1.msra.mxu0 %v1223
        %1241 = vmatprep.subr.mxu0 0.0
        %1242 = vmatpush1.msra.mxu0 %v1224
        %1243 = vmatprep.subr.mxu0 0.0
        %1244 = vmatpush1.msra.mxu0 %v1225
        %1245 = vmatprep.subr.mxu0 0.0
        %1246 = vmatpush1.msra.mxu0 %v1226
        %1247 = vmatprep.subr.mxu0 0.0
        %1248 = vmatpush1.msra.mxu0 %v1227
        %1249 = vmatprep.subr.mxu0 0.0
        %1250 = vmatpush1.msra.mxu0 %v1228
        %1251 = vmatprep.subr.mxu0 0.0
        %1252 = vmatpush1.msra.mxu0 %v1229
        %1253 = vmatprep.subr.mxu0 0.0
        %1254 = vmatpush1.msra.mxu0 %v1230
        %1255 = vmatprep.subr.mxu0 0.0
        %1256 = vmatpush1.msra.mxu0 %v1231
        %1257 = vmatprep.subr.mxu0 0.0
        %1258 = vmatpush1.msra.mxu0 %v1232
        %1259 = vmatprep.subr.mxu0 0.0
        %1260 = vmatpush1.msra.mxu0 %v1233
        %1261 = vmatprep.subr.mxu0 0.0
        %1262 = vmatpush1.msra.mxu0 %v1234
        %1263 = vmatprep.subr.mxu0 0.0
        %1264 = vmatpush1.msra.mxu0 %v1235
        %1265 = vmatprep.subr.mxu0 0.0
        %1266 = vmatpush1.msra.mxu0 %v1236
        %1267 = vmatprep.subr.mxu0 0.0
        %1268 = vmatpush1.msra.mxu0 %v1237
        %1269 = vmatprep.subr.mxu0 0.0
        %1270 = vmatpush1.msra.mxu0 %v1238
        %1271 = vmatprep.subr.mxu0 0.0
        %1272 = vmatpush1.msra.mxu0 0.0
        %1273 = vmatprep.subr.mxu0 0.0
        %1274 = vmatpush1.msra.mxu0 0.0
        %1275 = vmatprep.subr.mxu0 0.0
        %1276 = vmatpush1.msra.mxu0 0.0
        %1277 = vmatprep.subr.mxu0 0.0
        %1278 = vmatpush1.msra.mxu0 0.0
        %1279 = vmatprep.subr.mxu0 0.0
        %1280 = vmatpush1.msra.mxu0 0.0
        %1281 = vmatprep.subr.mxu0 0.0
        %1282 = vmatpush1.msra.mxu0 0.0
        %1283 = vmatprep.subr.mxu0 0.0
        %1284 = vmatpush1.msra.mxu0 0.0
        %1285 = vmatprep.subr.mxu0 0.0
        %1286 = vmatpush1.msra.mxu0 0.0
        %1287 = vmatprep.subr.mxu0 0.0
        %1288 = vmatpush1.msra.mxu0 0.0
        %1289 = vmatprep.subr.mxu0 0.0
        %1290 = vmatpush1.msra.mxu0 0.0
        %1291 = vmatprep.subr.mxu0 0.0
        %1292 = vmatpush1.msra.mxu0 0.0
        %1293 = vmatprep.subr.mxu0 0.0
        %1294 = vmatpush1.msra.mxu0 0.0
        %1295 = vmatprep.subr.mxu0 0.0
        %1296 = vmatpush1.msra.mxu0 0.0
        %1297 = vmatprep.subr.mxu0 0.0
        %1298 = vmatpush1.msra.mxu0 0.0
        %1299 = vmatprep.subr.mxu0 0.0
        %1300 = vmatpush1.msra.mxu0 0.0
        %1301 = vmatprep.subr.mxu0 0.0
        %1302 = vmatpush1.msra.mxu0 0.0
        %1303 = vmatprep.mubr.f32.mxu0 0.0
        %1304 = vmatmul.mubr.f32.gmra.mrb[0].mxu0 %v1204
        %v1305 = vpop.f32.mrb[0].mxu0
        %v1306 = vadd.f32 0.0, %v1305
        %v1307 = vpop.f32.mrb[0].mxu0
        %1308 = vdwg.mxu0
        %1309 = vmatprep.subr.mxu0 0.0
        %1310 = vmatpush1.msra.mxu0 %v1207
        %1311 = vmatprep.subr.mxu0 0.0
        %1312 = vmatpush1.msra.mxu0 %v1208
        %1313 = vmatprep.subr.mxu0 0.0
        %1314 = vmatpush1.msra.mxu0 %v1209
        %1315 = vmatprep.subr.mxu0 0.0
        %1316 = vmatpush1.msra.mxu0 %v1210
        %1317 = vmatprep.subr.mxu0 0.0
        %1318 = vmatpush1.msra.mxu0 %v1211
        %1319 = vmatprep.subr.mxu0 0.0
        %1320 = vmatpush1.msra.mxu0 %v1212
        %1321 = vmatprep.subr.mxu0 0.0
        %1322 = vmatpush1.msra.mxu0 %v1213
        %1323 = vmatprep.subr.mxu0 0.0
        %1324 = vmatpush1.msra.mxu0 %v1214
        %1325 = vmatprep.subr.mxu0 0.0
        %1326 = vmatpush1.msra.mxu0 %v1215
        %1327 = vmatprep.subr.mxu0 0.0
        %1328 = vmatpush1.msra.mxu0 %v1216
        %1329 = vmatprep.subr.mxu0 0.0
        %1330 = vmatpush1.msra.mxu0 %v1217
        %1331 = vmatprep.subr.mxu0 0.0
        %1332 = vmatpush1.msra.mxu0 %v1218
        %1333 = vmatprep.subr.mxu0 0.0
        %1334 = vmatpush1.msra.mxu0 %v1219
        %1335 = vmatprep.subr.mxu0 0.0
        %1336 = vmatpush1.msra.mxu0 %v1220
        %1337 = vmatprep.subr.mxu0 0.0
        %1338 = vmatpush1.msra.mxu0 %v1221
        %1339 = vmatprep.subr.mxu0 0.0
        %1340 = vmatpush1.msra.mxu0 %v1222
        %1341 = vmatprep.subr.mxu0 0.0
        %1342 = vmatpush1.msra.mxu0 0.0
        %1343 = vmatprep.subr.mxu0 0.0
        %1344 = vmatpush1.msra.mxu0 0.0
        %1345 = vmatprep.subr.mxu0 0.0
        %1346 = vmatpush1.msra.mxu0 0.0
        %1347 = vmatprep.subr.mxu0 0.0
        %1348 = vmatpush1.msra.mxu0 0.0
        %1349 = vmatprep.subr.mxu0 0.0
        %1350 = vmatpush1.msra.mxu0 0.0
        %1351 = vmatprep.subr.mxu0 0.0
        %1352 = vmatpush1.msra.mxu0 0.0
        %1353 = vmatprep.subr.mxu0 0.0
        %1354 = vmatpush1.msra.mxu0 0.0
        %1355 = vmatprep.subr.mxu0 0.0
        %1356 = vmatpush1.msra.mxu0 0.0
        %1357 = vmatprep.subr.mxu0 0.0
        %1358 = vmatpush1.msra.mxu0 0.0
        %1359 = vmatprep.subr.mxu0 0.0
        %1360 = vmatpush1.msra.mxu0 0.0
        %1361 = vmatprep.subr.mxu0 0.0
        %1362 = vmatpush1.msra.mxu0 0.0
        %1363 = vmatprep.subr.mxu0 0.0
        %1364 = vmatpush1.msra.mxu0 0.0
        %1365 = vmatprep.subr.mxu0 0.0
        %1366 = vmatpush1.msra.mxu0 0.0
        %1367 = vmatprep.subr.mxu0 0.0
        %1368 = vmatpush1.msra.mxu0 0.0
        %1369 = vmatprep.subr.mxu0 0.0
        %1370 = vmatpush1.msra.mxu0 0.0
        %1371 = vmatprep.subr.mxu0 0.0
        %1372 = vmatpush1.msra.mxu0 0.0
        %1373 = vmatprep.mubr.f32.mxu0 0.0
        %1374 = vmatmul.mubr.f32.gmra.mrb[0].mxu0 %v1130
        %v1375 = vpop.f32.mrb[0].mxu0
        %v1376 = vadd.f32 %v1306, %v1375
        %v1377 = vpop.f32.mrb[0].mxu0
        %1378 = vdwg.mxu0
        %v1379 = vld [vmem:[%s533] ss:$4 sm:$0xf]
        %s1380 = scalar_lea.vmem %s533, 2
        %v1381 = vld [vmem:[%s1380] ss:$4 sm:$0xf]
        %v1382 = vld [vmem:[#allocation7] sm:$0xff]
        %v1383 = vld [vmem:[#allocation7 + $0x8] sm:$0xff]
        %v1384 = vld [vmem:[#allocation7 + $0x10] sm:$0xff]
        %v1385 = vld [vmem:[#allocation7 + $0x18] sm:$0xff]
        %v1386 = vld [vmem:[#allocation7 + $0x20] sm:$0xff]
        %v1387 = vld [vmem:[#allocation7 + $0x28] sm:$0xff]
        %v1388 = vld [vmem:[#allocation7 + $0x30] sm:$0xff]
        %v1389 = vld [vmem:[#allocation7 + $0x38] sm:$0xff]
        %v1390 = vld [vmem:[#allocation9] sm:$0xff]
        %v1391 = vld [vmem:[#allocation9 + $0x8] sm:$0xff]
        %v1392 = vld [vmem:[#allocation9 + $0x10] sm:$0xff]
        %v1393 = vld [vmem:[#allocation9 + $0x18] sm:$0xff]
        %v1394 = vld [vmem:[#allocation9 + $0x20] sm:$0xff]
        %v1395 = vld [vmem:[#allocation9 + $0x28] sm:$0xff]
        %v1396 = vld [vmem:[#allocation9 + $0x30] sm:$0xff]
        %v1397 = vld [vmem:[#allocation9 + $0x38] sm:$0xff]
        %v1399 = vsel %vm734, %v1381, 0
        %1401 = vmatprep.subr.mxu0 0.0
        %1402 = vmatpush1.msra.mxu0 %v1390
        %1403 = vmatprep.subr.mxu0 0.0
        %1404 = vmatpush1.msra.mxu0 %v1391
        %1405 = vmatprep.subr.mxu0 0.0
        %1406 = vmatpush1.msra.mxu0 %v1392
        %1407 = vmatprep.subr.mxu0 0.0
        %1408 = vmatpush1.msra.mxu0 %v1393
        %1409 = vmatprep.subr.mxu0 0.0
        %1410 = vmatpush1.msra.mxu0 %v1394
        %1411 = vmatprep.subr.mxu0 0.0
        %1412 = vmatpush1.msra.mxu0 %v1395
        %1413 = vmatprep.subr.mxu0 0.0
        %1414 = vmatpush1.msra.mxu0 %v1396
        %1415 = vmatprep.subr.mxu0 0.0
        %1416 = vmatpush1.msra.mxu0 %v1397
        %1417 = vmatprep.subr.mxu0 0.0
        %1418 = vmatpush1.msra.mxu0 0.0
        %1419 = vmatprep.subr.mxu0 0.0
        %1420 = vmatpush1.msra.mxu0 0.0
        %1421 = vmatprep.subr.mxu0 0.0
        %1422 = vmatpush1.msra.mxu0 0.0
        %1423 = vmatprep.subr.mxu0 0.0
        %1424 = vmatpush1.msra.mxu0 0.0
        %1425 = vmatprep.subr.mxu0 0.0
        %1426 = vmatpush1.msra.mxu0 0.0
        %1427 = vmatprep.subr.mxu0 0.0
        %1428 = vmatpush1.msra.mxu0 0.0
        %1429 = vmatprep.subr.mxu0 0.0
        %1430 = vmatpush1.msra.mxu0 0.0
        %1431 = vmatprep.subr.mxu0 0.0
        %1432 = vmatpush1.msra.mxu0 0.0
        %1433 = vmatprep.subr.mxu0 0.0
        %1434 = vmatpush1.msra.mxu0 0.0
        %1435 = vmatprep.subr.mxu0 0.0
        %1436 = vmatpush1.msra.mxu0 0.0
        %1437 = vmatprep.subr.mxu0 0.0
        %1438 = vmatpush1.msra.mxu0 0.0
        %1439 = vmatprep.subr.mxu0 0.0
        %1440 = vmatpush1.msra.mxu0 0.0
        %1441 = vmatprep.subr.mxu0 0.0
        %1442 = vmatpush1.msra.mxu0 0.0
        %1443 = vmatprep.subr.mxu0 0.0
        %1444 = vmatpush1.msra.mxu0 0.0
        %1445 = vmatprep.subr.mxu0 0.0
        %1446 = vmatpush1.msra.mxu0 0.0
        %1447 = vmatprep.subr.mxu0 0.0
        %1448 = vmatpush1.msra.mxu0 0.0
        %1449 = vmatprep.subr.mxu0 0.0
        %1450 = vmatpush1.msra.mxu0 0.0
        %1451 = vmatprep.subr.mxu0 0.0
        %1452 = vmatpush1.msra.mxu0 0.0
        %1453 = vmatprep.subr.mxu0 0.0
        %1454 = vmatpush1.msra.mxu0 0.0
        %1455 = vmatprep.subr.mxu0 0.0
        %1456 = vmatpush1.msra.mxu0 0.0
        %1457 = vmatprep.subr.mxu0 0.0
        %1458 = vmatpush1.msra.mxu0 0.0
        %1459 = vmatprep.subr.mxu0 0.0
        %1460 = vmatpush1.msra.mxu0 0.0
        %1461 = vmatprep.subr.mxu0 0.0
        %1462 = vmatpush1.msra.mxu0 0.0
        %1463 = vmatprep.subr.mxu0 0.0
        %1464 = vmatpush1.msra.mxu0 0.0
        %1465 = vmatprep.mubr.f32.mxu0 0.0
        %1466 = vmatmul.mubr.f32.gmra.mrb[0].mxu0 %v1399
        %v1467 = vpop.f32.mrb[0].mxu0
        %v1468 = vadd.f32 0.0, %v1467
        %v1469 = vpop.f32.mrb[0].mxu0
        %1470 = vdwg.mxu0
        %v1472 = vsel %vm734, %v1379, 0
        %1474 = vmatprep.subr.mxu0 0.0
        %1475 = vmatpush1.msra.mxu0 %v1382
        %1476 = vmatprep.subr.mxu0 0.0
        %1477 = vmatpush1.msra.mxu0 %v1383
        %1478 = vmatprep.subr.mxu0 0.0
        %1479 = vmatpush1.msra.mxu0 %v1384
        %1480 = vmatprep.subr.mxu0 0.0
        %1481 = vmatpush1.msra.mxu0 %v1385
        %1482 = vmatprep.subr.mxu0 0.0
        %1483 = vmatpush1.msra.mxu0 %v1386
        %1484 = vmatprep.subr.mxu0 0.0
        %1485 = vmatpush1.msra.mxu0 %v1387
        %1486 = vmatprep.subr.mxu0 0.0
        %1487 = vmatpush1.msra.mxu0 %v1388
        %1488 = vmatprep.subr.mxu0 0.0
        %1489 = vmatpush1.msra.mxu0 %v1389
        %1490 = vmatprep.subr.mxu0 0.0
        %1491 = vmatpush1.msra.mxu0 0.0
        %1492 = vmatprep.subr.mxu0 0.0
        %1493 = vmatpush1.msra.mxu0 0.0
        %1494 = vmatprep.subr.mxu0 0.0
        %1495 = vmatpush1.msra.mxu0 0.0
        %1496 = vmatprep.subr.mxu0 0.0
        %1497 = vmatpush1.msra.mxu0 0.0
        %1498 = vmatprep.subr.mxu0 0.0
        %1499 = vmatpush1.msra.mxu0 0.0
        %1500 = vmatprep.subr.mxu0 0.0
        %1501 = vmatpush1.msra.mxu0 0.0
        %1502 = vmatprep.subr.mxu0 0.0
        %1503 = vmatpush1.msra.mxu0 0.0
        %1504 = vmatprep.subr.mxu0 0.0
        %1505 = vmatpush1.msra.mxu0 0.0
        %1506 = vmatprep.subr.mxu0 0.0
        %1507 = vmatpush1.msra.mxu0 0.0
        %1508 = vmatprep.subr.mxu0 0.0
        %1509 = vmatpush1.msra.mxu0 0.0
        %1510 = vmatprep.subr.mxu0 0.0
        %1511 = vmatpush1.msra.mxu0 0.0
        %1512 = vmatprep.subr.mxu0 0.0
        %1513 = vmatpush1.msra.mxu0 0.0
        %1514 = vmatprep.subr.mxu0 0.0
        %1515 = vmatpush1.msra.mxu0 0.0
        %1516 = vmatprep.subr.mxu0 0.0
        %1517 = vmatpush1.msra.mxu0 0.0
        %1518 = vmatprep.subr.mxu0 0.0
        %1519 = vmatpush1.msra.mxu0 0.0
        %1520 = vmatprep.subr.mxu0 0.0
        %1521 = vmatpush1.msra.mxu0 0.0
        %1522 = vmatprep.subr.mxu0 0.0
        %1523 = vmatpush1.msra.mxu0 0.0
        %1524 = vmatprep.subr.mxu0 0.0
        %1525 = vmatpush1.msra.mxu0 0.0
        %1526 = vmatprep.subr.mxu0 0.0
        %1527 = vmatpush1.msra.mxu0 0.0
        %1528 = vmatprep.subr.mxu0 0.0
        %1529 = vmatpush1.msra.mxu0 0.0
        %1530 = vmatprep.subr.mxu0 0.0
        %1531 = vmatpush1.msra.mxu0 0.0
        %1532 = vmatprep.subr.mxu0 0.0
        %1533 = vmatpush1.msra.mxu0 0.0
        %1534 = vmatprep.subr.mxu0 0.0
        %1535 = vmatpush1.msra.mxu0 0.0
        %1536 = vmatprep.subr.mxu0 0.0
        %1537 = vmatpush1.msra.mxu0 0.0
        %1538 = vmatprep.mubr.f32.mxu0 0.0
        %1539 = vmatmul.mubr.f32.gmra.mrb[0].mxu0 %v1472
        %v1540 = vpop.f32.mrb[0].mxu0
        %v1541 = vadd.f32 %v1468, %v1540
        %v1542 = vpop.f32.mrb[0].mxu0
        %1543 = vdwg.mxu0
        %v1544 = vld [vmem:[%s13] sm:$0x1]
        %v1546 = vlaneseq
        %v1547 = vshrl.u32 %v1546, 7
        %v1548 = vsub.s32 0, %v1547
        %v1549 = vrot.slane %v1544, %v1548
        %v1551 = vadd.f32 %v1541, %v1549
        %v1552 = vadd.f32 %v1376, %v1551
        %1553 = vst [vmem:[%s538] sm:$0xf] %v1552
        %p1554 = scmp.lt.s32.totalorder %s28, 1
        %s1555 = scalar_select %p1554, %s28, 1
        %s1556 = smul.addr %s1555, 4
        %s1557 = scalar_lea.vmem %s14, %s1556
        // Predicated region
        $region97: #{block_forward.1} parent=75 // pred_check
          %p1558 = pneg %p345
        $region98: #{block_forward.1} parent=75 // pred_check_branch
          %1560 = sbr.rel (%p1558) target = $region100
        $region99: #{block_forward.1} parent=75 // pred_region
          _
        $region100: #{block_forward.1} parent=75 // pred_fallthru
          _
      $region76: #{block_forward.1} parent=5 // pred_fallthru
        _
      %p1561 = scmp.le.s32.totalorder 2, %s23
      // Predicated region
      $region101: #{block_forward.1} parent=5 // pred_check
        %p1562 = pneg %p1561
      $region102: #{block_forward.1} parent=5 // pred_check_branch
        %1564 = sbr.rel (%p1562) target = $region104
      $region103: #{block_forward.1} parent=5 // pred_region
        %s1565 = ssub.s32 %s23, 2
        // Predicated region
        $region105: #{block_forward.1} parent=103 // pred_check
          %p1566 = pneg %p351
        $region106: #{block_forward.1} parent=103 // pred_check_branch
          %1568 = sbr.rel (%p1566) target = $region108
        $region107: #{block_forward.1} parent=103 // pred_region
          %p1569 = scmp.lt.s32.totalorder %s29, 1
          %s1570 = scalar_select %p1569, %s29, 1
          %s1571 = smul.addr %s1570, 4
          %s1572 = scalar_lea.vmem %s14, %s1571
        $region108: #{block_forward.1} parent=103 // pred_fallthru
          _
      $region104: #{block_forward.1} parent=5 // pred_fallthru
        _
    $region6: #{block_forward.1} parent=1 // loop_footer
      %s27 = sadd.s32 1, %s23
    $region7: #{block_forward.1} parent=1 // loop_footer_branch
      %22 = sbr.rel target = $region3
    $region8: #{block_forward.1} parent=1 // loop_exit
      _
    %1573 = vsyncpa [#allocation3], 1
    %s1574 = scalar_lea.sflag [#allocation3], 1
    %1575 = vsyncpa %s1574, 1
    %1576 = vsyncpa [#allocation5], 1
    %1577 = vsyncpa [#allocation8], 1

</llo_original>
